<compile_context>
chip_gen: v6e
topology: v6e:2x2x1
jax: 0.10.0
libtpu: 0.0.40
codegen_flags: <defaults>
</compile_context>

<pallas_src>
import jax
import jax.numpy as jnp
from jax import lax
from jax.experimental import pallas as pl
from jax.experimental.pallas import tpu as pltpu

EPS_BN = 1e-5     # nn.BatchNorm1d default eps
EPS_COS = 1e-8    # F.cosine_similarity default eps

# Small synthetic, lane-dense dimensions (real model: channel_dim=2048, dim=2048, pred_dim=512)
C_IN = 3
CHANNEL_DIM = 128  # encoder feature dim == projector input/hidden dim
DIM = 256          # SimSiam feature dim
PRED_DIM = 128     # predictor hidden dim

B = 4              # per-view batch (2 views -> 8 rows = one f32 sublane tile)
H = W = 8
KC = 9 * C_IN      # 3x3 conv contraction size (27)
K_PAD = 128        # contraction zero-padded to one full lane tile


# ----------------------------------------------------------------------------
# Fused kernel: conv-as-matmul + ReLU + GAP-as-matmul + projector + predictor + loss.
# Single invocation (no grid); all operands resident in VMEM (< 1 MiB total here).
# ----------------------------------------------------------------------------
def simsiam_kernel(slab_ref, convw_ref, pool_ref,
                   w1_ref, g1_ref, b1_ref,
                   w2_ref, g2_ref, b2_ref,
                   w3_ref,
                   w4_ref, g4_ref, b4_ref,
                   w5_ref, b5_ref,
                   loss_ref):
    # --- encoder stand-in ---------------------------------------------------
    # slab_ref: [2B*H*W, K_PAD] bf16 im2col rows, convw_ref: [K_PAD, CHANNEL_DIM] bf16
    act = jnp.dot(slab_ref[...], convw_ref[...],
                  preferred_element_type=jnp.float32)        # [2B*H*W, CHANNEL_DIM] f32
    act = jnp.maximum(act, 0.0)                              # ReLU (f32)
    # GAP as block-diagonal averaging matmul: pool_ref [2B, 2B*H*W] bf16 (1/HW folded in)
    f = jnp.dot(pool_ref[...], act.astype(jnp.bfloat16),
                preferred_element_type=jnp.float32)          # [2B, CHANNEL_DIM] f32

    # --- per-view masks for BatchNorm statistics -----------------------------
    R = 2 * B
    row = lax.broadcasted_iota(jnp.int32, (R, 1), 0)
    m0 = (row < B).astype(jnp.float32)                       # view-0 rows
    m1 = 1.0 - m0                                            # view-1 rows
    inv_b = jnp.float32(1.0 / B)

    def bn_per_view(x, gamma_ref=None, beta_ref=None):
        # BatchNorm1d forward, training mode (biased variance), stats per view half.
        mu0 = jnp.sum(x * m0, axis=0, keepdims=True) * inv_b
        mu1 = jnp.sum(x * m1, axis=0, keepdims=True) * inv_b
        mu = m0 * mu0 + m1 * mu1
        d = x - mu
        v0 = jnp.sum(d * d * m0, axis=0, keepdims=True) * inv_b
        v1 = jnp.sum(d * d * m1, axis=0, keepdims=True) * inv_b
        var = m0 * v0 + m1 * v1
        xn = d * lax.rsqrt(var + EPS_BN)
        if gamma_ref is not None:
            xn = xn * gamma_ref[...] + beta_ref[...]
        return xn

    def mm(x, w_ref):
        # bf16 MXU operands, f32 accumulation
        return jnp.dot(x.astype(jnp.bfloat16), w_ref[...],
                       preferred_element_type=jnp.float32)

    # --- projector: (Linear(no bias)+BN+ReLU) x2, Linear(no bias)+BN(affine=False) ---
    h = jnp.maximum(bn_per_view(mm(f, w1_ref), g1_ref, b1_ref), 0.0)
    h = jnp.maximum(bn_per_view(mm(h, w2_ref), g2_ref, b2_ref), 0.0)
    z = bn_per_view(mm(h, w3_ref))                           # [2B, DIM]

    # --- predictor: Linear(no bias)+BN+ReLU, Linear(with bias) ---
    h = jnp.maximum(bn_per_view(mm(z, w4_ref), g4_ref, b4_ref), 0.0)
    p = mm(h, w5_ref) + b5_ref[...]                          # [2B, DIM]

    # --- cosine loss; z is detached in PyTorch (forward value identical) ---
    # Pair p(view0) with z(view1) and vice versa by swapping the two row halves.
    z_sw = pltpu.roll(z, shift=B, axis=0)
    num = jnp.sum(p * z_sw, axis=1, keepdims=True)
    ssp = jnp.sum(p * p, axis=1, keepdims=True)
    ssz = jnp.sum(z_sw * z_sw, axis=1, keepdims=True)
    eps2 = jnp.float32(EPS_COS * EPS_COS)
    cs = num * lax.rsqrt(jnp.maximum(ssp, eps2)) * lax.rsqrt(jnp.maximum(ssz, eps2))
    # mean over all 2B rows == 0.5*(mean cos(p1,z2) + mean cos(p2,z1))
    loss_ref[...] = jnp.full((1, 1), -jnp.mean(cs), dtype=jnp.float32)


# ----------------------------------------------------------------------------
# Glue / wrapper
# ----------------------------------------------------------------------------
def _im2col_slab(x1, x2):
    """NCHW f32 -> bf16 im2col slab [2B*H*W, K_PAD] (layout plumbing only; ~72 KB at toy size)."""
    x = jnp.concatenate([x1, x2], axis=0)                    # [2B, C, H, W]
    x = jnp.transpose(x, (0, 2, 3, 1))                       # [2B, H, W, C]
    xp = jnp.pad(x, ((0, 0), (1, 1), (1, 1), (0, 0)))        # stride-1, pad-1 conv
    cols = [xp[:, ki:ki + H, kj:kj + W, :] for ki in range(3) for kj in range(3)]
    slab = jnp.concatenate(cols, axis=-1).reshape(2 * B * H * W, KC)
    slab = jnp.pad(slab, ((0, 0), (0, K_PAD - KC)))          # zero-pad contraction to 128
    return slab.astype(jnp.bfloat16)


def init_params(key):
    ks = jax.random.split(key, 7)

    def lin(k, fan_in, fan_out):   # Linear weight stored bf16 (halved VMEM/DMA bytes)
        return (jax.random.normal(k, (fan_in, fan_out), jnp.float32)
                / jnp.sqrt(jnp.float32(fan_in))).astype(jnp.bfloat16)

    # conv weight: PyTorch [C_out, C_in, 3, 3] -> [(kh,kw,c) = 27, C_out] -> zero-pad K to 128
    conv_pt = jax.random.normal(ks[0], (CHANNEL_DIM, C_IN, 3, 3), jnp.float32) * 0.1
    conv_w = jnp.transpose(conv_pt, (2, 3, 1, 0)).reshape(KC, CHANNEL_DIM)
    conv_w = jnp.pad(conv_w, ((0, K_PAD - KC), (0, 0))).astype(jnp.bfloat16)

    # block-diagonal averaging matrix for GAP (1/HW is exact in bf16)
    r = jnp.arange(2 * B)[:, None]
    c = jnp.arange(2 * B * H * W)[None, :]
    pool = jnp.where(c // (H * W) == r, 1.0 / (H * W), 0.0).astype(jnp.bfloat16)

    ones = lambda n: jnp.ones((1, n), jnp.float32)
    zeros = lambda n: jnp.zeros((1, n), jnp.float32)
    return dict(
        conv_w=conv_w, pool=pool,
        # projector
        w1=lin(ks[1], CHANNEL_DIM, CHANNEL_DIM), g1=ones(CHANNEL_DIM), b1=zeros(CHANNEL_DIM),
        w2=lin(ks[2], CHANNEL_DIM, CHANNEL_DIM), g2=ones(CHANNEL_DIM), b2=zeros(CHANNEL_DIM),
        w3=lin(ks[3], CHANNEL_DIM, DIM),
        # predictor
        w4=lin(ks[4], DIM, PRED_DIM), g4=ones(PRED_DIM), b4=zeros(PRED_DIM),
        w5=lin(ks[5], PRED_DIM, DIM),
        b5=jax.random.normal(ks[6], (1, DIM), jnp.float32) * 0.01,
    )


def simsiam_forward(x1, x2, params):
    slab = _im2col_slab(x1, x2)                              # [512, 128] bf16

    vmem = pl.BlockSpec(memory_space=pltpu.MemorySpace.VMEM)
    args = (slab, params['conv_w'], params['pool'],
            params['w1'], params['g1'], params['b1'],
            params['w2'], params['g2'], params['b2'],
            params['w3'],
            params['w4'], params['g4'], params['b4'],
            params['w5'], params['b5'])

    # Single fused invocation: encoder + heads + loss (no grid; BN / cosine loss
    # need the full 2B-row batch anyway).  (1,1) VMEM scalar output: one masked
    # store, negligible; kept in VMEM for lowering robustness.
    loss = pl.pallas_call(
        simsiam_kernel,
        out_shape=jax.ShapeDtypeStruct((1, 1), jnp.float32),
        in_specs=[vmem] * len(args),
        out_specs=vmem,
        compiler_params=pltpu.CompilerParams(vmem_limit_bytes=32 * 1024 * 1024),
    )(*args)
    return loss[0, 0]


if __name__ == "__main__":
    key = jax.random.PRNGKey(0)
    k_param, k_x1, k_x2 = jax.random.split(key, 3)

    params = init_params(k_param)

    x1 = jax.random.normal(k_x1, (B, C_IN, H, W), jnp.float32)
    x2 = jax.random.normal(k_x2, (B, C_IN, H, W), jnp.float32)

    loss = jax.jit(simsiam_forward)(x1, x2, params)
    loss = jax.block_until_ready(loss)
    assert jnp.isfinite(loss)
    print("KERNEL_OK")
</pallas_src>

<mosaic_0001>
module attributes {stable_mosaic.version = 11 : i64} {
  func.func @simsiam_kernel(%arg0: memref<512x128xbf16, #tpu.memory_space<vmem>>, %arg1: memref<128x128xbf16, #tpu.memory_space<vmem>>, %arg2: memref<8x512xbf16, #tpu.memory_space<vmem>>, %arg3: memref<128x128xbf16, #tpu.memory_space<vmem>>, %arg4: memref<1x128xf32, #tpu.memory_space<vmem>>, %arg5: memref<1x128xf32, #tpu.memory_space<vmem>>, %arg6: memref<128x128xbf16, #tpu.memory_space<vmem>>, %arg7: memref<1x128xf32, #tpu.memory_space<vmem>>, %arg8: memref<1x128xf32, #tpu.memory_space<vmem>>, %arg9: memref<128x256xbf16, #tpu.memory_space<vmem>>, %arg10: memref<256x128xbf16, #tpu.memory_space<vmem>>, %arg11: memref<1x128xf32, #tpu.memory_space<vmem>>, %arg12: memref<1x128xf32, #tpu.memory_space<vmem>>, %arg13: memref<128x256xbf16, #tpu.memory_space<vmem>>, %arg14: memref<1x256xf32, #tpu.memory_space<vmem>>, %arg15: memref<1x1xf32, #tpu.memory_space<vmem>>) attributes {dimension_semantics = [], scalar_prefetch = 0 : i64, scratch_operands = 0 : i64, tpu.core_type = #tpu.core_type<tc>} {
    %c0 = arith.constant 0 : index
    %c0_0 = arith.constant 0 : index
    %0 = vector.load %arg0[%c0, %c0_0] : memref<512x128xbf16, #tpu.memory_space<vmem>>, vector<512x128xbf16>
    %c0_1 = arith.constant 0 : index
    %c0_2 = arith.constant 0 : index
    %1 = vector.load %arg1[%c0_1, %c0_2] : memref<128x128xbf16, #tpu.memory_space<vmem>>, vector<128x128xbf16>
    %cst = arith.constant dense<0.000000e+00> : vector<512x128xf32>
    %2 = tpu.matmul %0, %1, %cst {dimension_numbers = #tpu.dot_dimension_numbers<[1], [0], [0], [1], [0, 0, 1, 1], [], []>} : vector<512x128xbf16>, vector<128x128xbf16>, vector<512x128xf32> -> vector<512x128xf32>
    %cst_3 = arith.constant 0.000000e+00 : f32
    %3 = vector.broadcast %cst_3 : f32 to vector<512x128xf32>
    %4 = arith.maximumf %2, %3 : vector<512x128xf32>
    %c0_4 = arith.constant 0 : index
    %c0_5 = arith.constant 0 : index
    %5 = vector.load %arg2[%c0_4, %c0_5] : memref<8x512xbf16, #tpu.memory_space<vmem>>, vector<8x512xbf16>
    %6 = arith.truncf %4 : vector<512x128xf32> to vector<512x128xbf16>
    %cst_6 = arith.constant dense<0.000000e+00> : vector<8x128xf32>
    %7 = tpu.matmul %5, %6, %cst_6 {dimension_numbers = #tpu.dot_dimension_numbers<[1], [0], [0], [1], [0, 0, 1, 1], [], []>} : vector<8x512xbf16>, vector<512x128xbf16>, vector<8x128xf32> -> vector<8x128xf32>
    %8 = tpu.iota {dimensions = array<i32: 0>} : vector<8x1xi32>
    %c4_i32 = arith.constant 4 : i32
    %9 = vector.broadcast %c4_i32 : i32 to vector<8x1xi32>
    %10 = arith.cmpi slt, %8, %9 : vector<8x1xi32>
    %11 = arith.extui %10 : vector<8x1xi1> to vector<8x1xi32>
    %12 = arith.sitofp %11 : vector<8x1xi32> to vector<8x1xf32>
    %cst_7 = arith.constant 1.000000e+00 : f32
    %13 = vector.broadcast %cst_7 : f32 to vector<8x1xf32>
    %14 = arith.subf %13, %12 : vector<8x1xf32>
    %15 = arith.truncf %7 : vector<8x128xf32> to vector<8x128xbf16>
    %c0_8 = arith.constant 0 : index
    %c0_9 = arith.constant 0 : index
    %16 = vector.load %arg3[%c0_8, %c0_9] : memref<128x128xbf16, #tpu.memory_space<vmem>>, vector<128x128xbf16>
    %cst_10 = arith.constant dense<0.000000e+00> : vector<8x128xf32>
    %17 = tpu.matmul %15, %16, %cst_10 {dimension_numbers = #tpu.dot_dimension_numbers<[1], [0], [0], [1], [0, 0, 1, 1], [], []>} : vector<8x128xbf16>, vector<128x128xbf16>, vector<8x128xf32> -> vector<8x128xf32>
    %18 = vector.broadcast %12 : vector<8x1xf32> to vector<8x128xf32>
    %19 = arith.mulf %17, %18 : vector<8x128xf32>
    %cst_11 = arith.constant dense<0.000000e+00> : vector<128xf32>
    %20 = vector.multi_reduction <add>, %19, %cst_11 [0] : vector<8x128xf32> to vector<128xf32>
    %21 = vector.shape_cast %20 : vector<128xf32> to vector<1x128xf32>
    %cst_12 = arith.constant 2.500000e-01 : f32
    %22 = vector.broadcast %cst_12 : f32 to vector<1x128xf32>
    %23 = arith.mulf %21, %22 : vector<1x128xf32>
    %24 = vector.broadcast %14 : vector<8x1xf32> to vector<8x128xf32>
    %25 = arith.mulf %17, %24 : vector<8x128xf32>
    %cst_13 = arith.constant dense<0.000000e+00> : vector<128xf32>
    %26 = vector.multi_reduction <add>, %25, %cst_13 [0] : vector<8x128xf32> to vector<128xf32>
    %27 = vector.shape_cast %26 : vector<128xf32> to vector<1x128xf32>
    %cst_14 = arith.constant 2.500000e-01 : f32
    %28 = vector.broadcast %cst_14 : f32 to vector<1x128xf32>
    %29 = arith.mulf %27, %28 : vector<1x128xf32>
    %30 = vector.broadcast %12 : vector<8x1xf32> to vector<8x128xf32>
    %31 = vector.broadcast %23 : vector<1x128xf32> to vector<8x128xf32>
    %32 = arith.mulf %30, %31 : vector<8x128xf32>
    %33 = vector.broadcast %14 : vector<8x1xf32> to vector<8x128xf32>
    %34 = vector.broadcast %29 : vector<1x128xf32> to vector<8x128xf32>
    %35 = arith.mulf %33, %34 : vector<8x128xf32>
    %36 = arith.addf %32, %35 : vector<8x128xf32>
    %37 = arith.subf %17, %36 : vector<8x128xf32>
    %38 = arith.mulf %37, %37 : vector<8x128xf32>
    %39 = vector.broadcast %12 : vector<8x1xf32> to vector<8x128xf32>
    %40 = arith.mulf %38, %39 : vector<8x128xf32>
    %cst_15 = arith.constant dense<0.000000e+00> : vector<128xf32>
    %41 = vector.multi_reduction <add>, %40, %cst_15 [0] : vector<8x128xf32> to vector<128xf32>
    %42 = vector.shape_cast %41 : vector<128xf32> to vector<1x128xf32>
    %cst_16 = arith.constant 2.500000e-01 : f32
    %43 = vector.broadcast %cst_16 : f32 to vector<1x128xf32>
    %44 = arith.mulf %42, %43 : vector<1x128xf32>
    %45 = arith.mulf %37, %37 : vector<8x128xf32>
    %46 = vector.broadcast %14 : vector<8x1xf32> to vector<8x128xf32>
    %47 = arith.mulf %45, %46 : vector<8x128xf32>
    %cst_17 = arith.constant dense<0.000000e+00> : vector<128xf32>
    %48 = vector.multi_reduction <add>, %47, %cst_17 [0] : vector<8x128xf32> to vector<128xf32>
    %49 = vector.shape_cast %48 : vector<128xf32> to vector<1x128xf32>
    %cst_18 = arith.constant 2.500000e-01 : f32
    %50 = vector.broadcast %cst_18 : f32 to vector<1x128xf32>
    %51 = arith.mulf %49, %50 : vector<1x128xf32>
    %52 = vector.broadcast %12 : vector<8x1xf32> to vector<8x128xf32>
    %53 = vector.broadcast %44 : vector<1x128xf32> to vector<8x128xf32>
    %54 = arith.mulf %52, %53 : vector<8x128xf32>
    %55 = vector.broadcast %14 : vector<8x1xf32> to vector<8x128xf32>
    %56 = vector.broadcast %51 : vector<1x128xf32> to vector<8x128xf32>
    %57 = arith.mulf %55, %56 : vector<8x128xf32>
    %58 = arith.addf %54, %57 : vector<8x128xf32>
    %cst_19 = arith.constant 9.99999974E-6 : f32
    %59 = vector.broadcast %cst_19 : f32 to vector<8x128xf32>
    %60 = arith.addf %58, %59 : vector<8x128xf32>
    %61 = math.rsqrt %60 : vector<8x128xf32>
    %62 = arith.mulf %37, %61 : vector<8x128xf32>
    %c0_20 = arith.constant 0 : index
    %c0_21 = arith.constant 0 : index
    %63 = vector.load %arg4[%c0_20, %c0_21] : memref<1x128xf32, #tpu.memory_space<vmem>>, vector<1x128xf32>
    %64 = vector.broadcast %63 : vector<1x128xf32> to vector<8x128xf32>
    %65 = arith.mulf %62, %64 : vector<8x128xf32>
    %c0_22 = arith.constant 0 : index
    %c0_23 = arith.constant 0 : index
    %66 = vector.load %arg5[%c0_22, %c0_23] : memref<1x128xf32, #tpu.memory_space<vmem>>, vector<1x128xf32>
    %67 = vector.broadcast %66 : vector<1x128xf32> to vector<8x128xf32>
    %68 = arith.addf %65, %67 : vector<8x128xf32>
    %cst_24 = arith.constant 0.000000e+00 : f32
    %69 = vector.broadcast %cst_24 : f32 to vector<8x128xf32>
    %70 = arith.maximumf %68, %69 : vector<8x128xf32>
    %71 = arith.truncf %70 : vector<8x128xf32> to vector<8x128xbf16>
    %c0_25 = arith.constant 0 : index
    %c0_26 = arith.constant 0 : index
    %72 = vector.load %arg6[%c0_25, %c0_26] : memref<128x128xbf16, #tpu.memory_space<vmem>>, vector<128x128xbf16>
    %cst_27 = arith.constant dense<0.000000e+00> : vector<8x128xf32>
    %73 = tpu.matmul %71, %72, %cst_27 {dimension_numbers = #tpu.dot_dimension_numbers<[1], [0], [0], [1], [0, 0, 1, 1], [], []>} : vector<8x128xbf16>, vector<128x128xbf16>, vector<8x128xf32> -> vector<8x128xf32>
    %74 = vector.broadcast %12 : vector<8x1xf32> to vector<8x128xf32>
    %75 = arith.mulf %73, %74 : vector<8x128xf32>
    %cst_28 = arith.constant dense<0.000000e+00> : vector<128xf32>
    %76 = vector.multi_reduction <add>, %75, %cst_28 [0] : vector<8x128xf32> to vector<128xf32>
    %77 = vector.shape_cast %76 : vector<128xf32> to vector<1x128xf32>
    %cst_29 = arith.constant 2.500000e-01 : f32
    %78 = vector.broadcast %cst_29 : f32 to vector<1x128xf32>
    %79 = arith.mulf %77, %78 : vector<1x128xf32>
    %80 = vector.broadcast %14 : vector<8x1xf32> to vector<8x128xf32>
    %81 = arith.mulf %73, %80 : vector<8x128xf32>
    %cst_30 = arith.constant dense<0.000000e+00> : vector<128xf32>
    %82 = vector.multi_reduction <add>, %81, %cst_30 [0] : vector<8x128xf32> to vector<128xf32>
    %83 = vector.shape_cast %82 : vector<128xf32> to vector<1x128xf32>
    %cst_31 = arith.constant 2.500000e-01 : f32
    %84 = vector.broadcast %cst_31 : f32 to vector<1x128xf32>
    %85 = arith.mulf %83, %84 : vector<1x128xf32>
    %86 = vector.broadcast %12 : vector<8x1xf32> to vector<8x128xf32>
    %87 = vector.broadcast %79 : vector<1x128xf32> to vector<8x128xf32>
    %88 = arith.mulf %86, %87 : vector<8x128xf32>
    %89 = vector.broadcast %14 : vector<8x1xf32> to vector<8x128xf32>
    %90 = vector.broadcast %85 : vector<1x128xf32> to vector<8x128xf32>
    %91 = arith.mulf %89, %90 : vector<8x128xf32>
    %92 = arith.addf %88, %91 : vector<8x128xf32>
    %93 = arith.subf %73, %92 : vector<8x128xf32>
    %94 = arith.mulf %93, %93 : vector<8x128xf32>
    %95 = vector.broadcast %12 : vector<8x1xf32> to vector<8x128xf32>
    %96 = arith.mulf %94, %95 : vector<8x128xf32>
    %cst_32 = arith.constant dense<0.000000e+00> : vector<128xf32>
    %97 = vector.multi_reduction <add>, %96, %cst_32 [0] : vector<8x128xf32> to vector<128xf32>
    %98 = vector.shape_cast %97 : vector<128xf32> to vector<1x128xf32>
    %cst_33 = arith.constant 2.500000e-01 : f32
    %99 = vector.broadcast %cst_33 : f32 to vector<1x128xf32>
    %100 = arith.mulf %98, %99 : vector<1x128xf32>
    %101 = arith.mulf %93, %93 : vector<8x128xf32>
    %102 = vector.broadcast %14 : vector<8x1xf32> to vector<8x128xf32>
    %103 = arith.mulf %101, %102 : vector<8x128xf32>
    %cst_34 = arith.constant dense<0.000000e+00> : vector<128xf32>
    %104 = vector.multi_reduction <add>, %103, %cst_34 [0] : vector<8x128xf32> to vector<128xf32>
    %105 = vector.shape_cast %104 : vector<128xf32> to vector<1x128xf32>
    %cst_35 = arith.constant 2.500000e-01 : f32
    %106 = vector.broadcast %cst_35 : f32 to vector<1x128xf32>
    %107 = arith.mulf %105, %106 : vector<1x128xf32>
    %108 = vector.broadcast %12 : vector<8x1xf32> to vector<8x128xf32>
    %109 = vector.broadcast %100 : vector<1x128xf32> to vector<8x128xf32>
    %110 = arith.mulf %108, %109 : vector<8x128xf32>
    %111 = vector.broadcast %14 : vector<8x1xf32> to vector<8x128xf32>
    %112 = vector.broadcast %107 : vector<1x128xf32> to vector<8x128xf32>
    %113 = arith.mulf %111, %112 : vector<8x128xf32>
    %114 = arith.addf %110, %113 : vector<8x128xf32>
    %cst_36 = arith.constant 9.99999974E-6 : f32
    %115 = vector.broadcast %cst_36 : f32 to vector<8x128xf32>
    %116 = arith.addf %114, %115 : vector<8x128xf32>
    %117 = math.rsqrt %116 : vector<8x128xf32>
    %118 = arith.mulf %93, %117 : vector<8x128xf32>
    %c0_37 = arith.constant 0 : index
    %c0_38 = arith.constant 0 : index
    %119 = vector.load %arg7[%c0_37, %c0_38] : memref<1x128xf32, #tpu.memory_space<vmem>>, vector<1x128xf32>
    %120 = vector.broadcast %119 : vector<1x128xf32> to vector<8x128xf32>
    %121 = arith.mulf %118, %120 : vector<8x128xf32>
    %c0_39 = arith.constant 0 : index
    %c0_40 = arith.constant 0 : index
    %122 = vector.load %arg8[%c0_39, %c0_40] : memref<1x128xf32, #tpu.memory_space<vmem>>, vector<1x128xf32>
    %123 = vector.broadcast %122 : vector<1x128xf32> to vector<8x128xf32>
    %124 = arith.addf %121, %123 : vector<8x128xf32>
    %cst_41 = arith.constant 0.000000e+00 : f32
    %125 = vector.broadcast %cst_41 : f32 to vector<8x128xf32>
    %126 = arith.maximumf %124, %125 : vector<8x128xf32>
    %127 = arith.truncf %126 : vector<8x128xf32> to vector<8x128xbf16>
    %c0_42 = arith.constant 0 : index
    %c0_43 = arith.constant 0 : index
    %128 = vector.load %arg9[%c0_42, %c0_43] : memref<128x256xbf16, #tpu.memory_space<vmem>>, vector<128x256xbf16>
    %cst_44 = arith.constant dense<0.000000e+00> : vector<8x256xf32>
    %129 = tpu.matmul %127, %128, %cst_44 {dimension_numbers = #tpu.dot_dimension_numbers<[1], [0], [0], [1], [0, 0, 1, 1], [], []>} : vector<8x128xbf16>, vector<128x256xbf16>, vector<8x256xf32> -> vector<8x256xf32>
    %130 = vector.broadcast %12 : vector<8x1xf32> to vector<8x256xf32>
    %131 = arith.mulf %129, %130 : vector<8x256xf32>
    %cst_45 = arith.constant dense<0.000000e+00> : vector<256xf32>
    %132 = vector.multi_reduction <add>, %131, %cst_45 [0] : vector<8x256xf32> to vector<256xf32>
    %133 = vector.shape_cast %132 : vector<256xf32> to vector<1x256xf32>
    %cst_46 = arith.constant 2.500000e-01 : f32
    %134 = vector.broadcast %cst_46 : f32 to vector<1x256xf32>
    %135 = arith.mulf %133, %134 : vector<1x256xf32>
    %136 = vector.broadcast %14 : vector<8x1xf32> to vector<8x256xf32>
    %137 = arith.mulf %129, %136 : vector<8x256xf32>
    %cst_47 = arith.constant dense<0.000000e+00> : vector<256xf32>
    %138 = vector.multi_reduction <add>, %137, %cst_47 [0] : vector<8x256xf32> to vector<256xf32>
    %139 = vector.shape_cast %138 : vector<256xf32> to vector<1x256xf32>
    %cst_48 = arith.constant 2.500000e-01 : f32
    %140 = vector.broadcast %cst_48 : f32 to vector<1x256xf32>
    %141 = arith.mulf %139, %140 : vector<1x256xf32>
    %142 = vector.broadcast %12 : vector<8x1xf32> to vector<8x256xf32>
    %143 = vector.broadcast %135 : vector<1x256xf32> to vector<8x256xf32>
    %144 = arith.mulf %142, %143 : vector<8x256xf32>
    %145 = vector.broadcast %14 : vector<8x1xf32> to vector<8x256xf32>
    %146 = vector.broadcast %141 : vector<1x256xf32> to vector<8x256xf32>
    %147 = arith.mulf %145, %146 : vector<8x256xf32>
    %148 = arith.addf %144, %147 : vector<8x256xf32>
    %149 = arith.subf %129, %148 : vector<8x256xf32>
    %150 = arith.mulf %149, %149 : vector<8x256xf32>
    %151 = vector.broadcast %12 : vector<8x1xf32> to vector<8x256xf32>
    %152 = arith.mulf %150, %151 : vector<8x256xf32>
    %cst_49 = arith.constant dense<0.000000e+00> : vector<256xf32>
    %153 = vector.multi_reduction <add>, %152, %cst_49 [0] : vector<8x256xf32> to vector<256xf32>
    %154 = vector.shape_cast %153 : vector<256xf32> to vector<1x256xf32>
    %cst_50 = arith.constant 2.500000e-01 : f32
    %155 = vector.broadcast %cst_50 : f32 to vector<1x256xf32>
    %156 = arith.mulf %154, %155 : vector<1x256xf32>
    %157 = arith.mulf %149, %149 : vector<8x256xf32>
    %158 = vector.broadcast %14 : vector<8x1xf32> to vector<8x256xf32>
    %159 = arith.mulf %157, %158 : vector<8x256xf32>
    %cst_51 = arith.constant dense<0.000000e+00> : vector<256xf32>
    %160 = vector.multi_reduction <add>, %159, %cst_51 [0] : vector<8x256xf32> to vector<256xf32>
    %161 = vector.shape_cast %160 : vector<256xf32> to vector<1x256xf32>
    %cst_52 = arith.constant 2.500000e-01 : f32
    %162 = vector.broadcast %cst_52 : f32 to vector<1x256xf32>
    %163 = arith.mulf %161, %162 : vector<1x256xf32>
    %164 = vector.broadcast %12 : vector<8x1xf32> to vector<8x256xf32>
    %165 = vector.broadcast %156 : vector<1x256xf32> to vector<8x256xf32>
    %166 = arith.mulf %164, %165 : vector<8x256xf32>
    %167 = vector.broadcast %14 : vector<8x1xf32> to vector<8x256xf32>
    %168 = vector.broadcast %163 : vector<1x256xf32> to vector<8x256xf32>
    %169 = arith.mulf %167, %168 : vector<8x256xf32>
    %170 = arith.addf %166, %169 : vector<8x256xf32>
    %cst_53 = arith.constant 9.99999974E-6 : f32
    %171 = vector.broadcast %cst_53 : f32 to vector<8x256xf32>
    %172 = arith.addf %170, %171 : vector<8x256xf32>
    %173 = math.rsqrt %172 : vector<8x256xf32>
    %174 = arith.mulf %149, %173 : vector<8x256xf32>
    %175 = arith.truncf %174 : vector<8x256xf32> to vector<8x256xbf16>
    %c0_54 = arith.constant 0 : index
    %c0_55 = arith.constant 0 : index
    %176 = vector.load %arg10[%c0_54, %c0_55] : memref<256x128xbf16, #tpu.memory_space<vmem>>, vector<256x128xbf16>
    %cst_56 = arith.constant dense<0.000000e+00> : vector<8x128xf32>
    %177 = tpu.matmul %175, %176, %cst_56 {dimension_numbers = #tpu.dot_dimension_numbers<[1], [0], [0], [1], [0, 0, 1, 1], [], []>} : vector<8x256xbf16>, vector<256x128xbf16>, vector<8x128xf32> -> vector<8x128xf32>
    %178 = vector.broadcast %12 : vector<8x1xf32> to vector<8x128xf32>
    %179 = arith.mulf %177, %178 : vector<8x128xf32>
    %cst_57 = arith.constant dense<0.000000e+00> : vector<128xf32>
    %180 = vector.multi_reduction <add>, %179, %cst_57 [0] : vector<8x128xf32> to vector<128xf32>
    %181 = vector.shape_cast %180 : vector<128xf32> to vector<1x128xf32>
    %cst_58 = arith.constant 2.500000e-01 : f32
    %182 = vector.broadcast %cst_58 : f32 to vector<1x128xf32>
    %183 = arith.mulf %181, %182 : vector<1x128xf32>
    %184 = vector.broadcast %14 : vector<8x1xf32> to vector<8x128xf32>
    %185 = arith.mulf %177, %184 : vector<8x128xf32>
    %cst_59 = arith.constant dense<0.000000e+00> : vector<128xf32>
    %186 = vector.multi_reduction <add>, %185, %cst_59 [0] : vector<8x128xf32> to vector<128xf32>
    %187 = vector.shape_cast %186 : vector<128xf32> to vector<1x128xf32>
    %cst_60 = arith.constant 2.500000e-01 : f32
    %188 = vector.broadcast %cst_60 : f32 to vector<1x128xf32>
    %189 = arith.mulf %187, %188 : vector<1x128xf32>
    %190 = vector.broadcast %12 : vector<8x1xf32> to vector<8x128xf32>
    %191 = vector.broadcast %183 : vector<1x128xf32> to vector<8x128xf32>
    %192 = arith.mulf %190, %191 : vector<8x128xf32>
    %193 = vector.broadcast %14 : vector<8x1xf32> to vector<8x128xf32>
    %194 = vector.broadcast %189 : vector<1x128xf32> to vector<8x128xf32>
    %195 = arith.mulf %193, %194 : vector<8x128xf32>
    %196 = arith.addf %192, %195 : vector<8x128xf32>
    %197 = arith.subf %177, %196 : vector<8x128xf32>
    %198 = arith.mulf %197, %197 : vector<8x128xf32>
    %199 = vector.broadcast %12 : vector<8x1xf32> to vector<8x128xf32>
    %200 = arith.mulf %198, %199 : vector<8x128xf32>
    %cst_61 = arith.constant dense<0.000000e+00> : vector<128xf32>
    %201 = vector.multi_reduction <add>, %200, %cst_61 [0] : vector<8x128xf32> to vector<128xf32>
    %202 = vector.shape_cast %201 : vector<128xf32> to vector<1x128xf32>
    %cst_62 = arith.constant 2.500000e-01 : f32
    %203 = vector.broadcast %cst_62 : f32 to vector<1x128xf32>
    %204 = arith.mulf %202, %203 : vector<1x128xf32>
    %205 = arith.mulf %197, %197 : vector<8x128xf32>
    %206 = vector.broadcast %14 : vector<8x1xf32> to vector<8x128xf32>
    %207 = arith.mulf %205, %206 : vector<8x128xf32>
    %cst_63 = arith.constant dense<0.000000e+00> : vector<128xf32>
    %208 = vector.multi_reduction <add>, %207, %cst_63 [0] : vector<8x128xf32> to vector<128xf32>
    %209 = vector.shape_cast %208 : vector<128xf32> to vector<1x128xf32>
    %cst_64 = arith.constant 2.500000e-01 : f32
    %210 = vector.broadcast %cst_64 : f32 to vector<1x128xf32>
    %211 = arith.mulf %209, %210 : vector<1x128xf32>
    %212 = vector.broadcast %12 : vector<8x1xf32> to vector<8x128xf32>
    %213 = vector.broadcast %204 : vector<1x128xf32> to vector<8x128xf32>
    %214 = arith.mulf %212, %213 : vector<8x128xf32>
    %215 = vector.broadcast %14 : vector<8x1xf32> to vector<8x128xf32>
    %216 = vector.broadcast %211 : vector<1x128xf32> to vector<8x128xf32>
    %217 = arith.mulf %215, %216 : vector<8x128xf32>
    %218 = arith.addf %214, %217 : vector<8x128xf32>
    %cst_65 = arith.constant 9.99999974E-6 : f32
    %219 = vector.broadcast %cst_65 : f32 to vector<8x128xf32>
    %220 = arith.addf %218, %219 : vector<8x128xf32>
    %221 = math.rsqrt %220 : vector<8x128xf32>
    %222 = arith.mulf %197, %221 : vector<8x128xf32>
    %c0_66 = arith.constant 0 : index
    %c0_67 = arith.constant 0 : index
    %223 = vector.load %arg11[%c0_66, %c0_67] : memref<1x128xf32, #tpu.memory_space<vmem>>, vector<1x128xf32>
    %224 = vector.broadcast %223 : vector<1x128xf32> to vector<8x128xf32>
    %225 = arith.mulf %222, %224 : vector<8x128xf32>
    %c0_68 = arith.constant 0 : index
    %c0_69 = arith.constant 0 : index
    %226 = vector.load %arg12[%c0_68, %c0_69] : memref<1x128xf32, #tpu.memory_space<vmem>>, vector<1x128xf32>
    %227 = vector.broadcast %226 : vector<1x128xf32> to vector<8x128xf32>
    %228 = arith.addf %225, %227 : vector<8x128xf32>
    %cst_70 = arith.constant 0.000000e+00 : f32
    %229 = vector.broadcast %cst_70 : f32 to vector<8x128xf32>
    %230 = arith.maximumf %228, %229 : vector<8x128xf32>
    %231 = arith.truncf %230 : vector<8x128xf32> to vector<8x128xbf16>
    %c0_71 = arith.constant 0 : index
    %c0_72 = arith.constant 0 : index
    %232 = vector.load %arg13[%c0_71, %c0_72] : memref<128x256xbf16, #tpu.memory_space<vmem>>, vector<128x256xbf16>
    %cst_73 = arith.constant dense<0.000000e+00> : vector<8x256xf32>
    %233 = tpu.matmul %231, %232, %cst_73 {dimension_numbers = #tpu.dot_dimension_numbers<[1], [0], [0], [1], [0, 0, 1, 1], [], []>} : vector<8x128xbf16>, vector<128x256xbf16>, vector<8x256xf32> -> vector<8x256xf32>
    %c0_74 = arith.constant 0 : index
    %c0_75 = arith.constant 0 : index
    %234 = vector.load %arg14[%c0_74, %c0_75] : memref<1x256xf32, #tpu.memory_space<vmem>>, vector<1x256xf32>
    %235 = vector.broadcast %234 : vector<1x256xf32> to vector<8x256xf32>
    %236 = arith.addf %233, %235 : vector<8x256xf32>
    %c4_i32_76 = arith.constant 4 : i32
    %237 = tpu.dynamic_rotate %174 by %c4_i32_76 dim 0 : vector<8x256xf32>, i32 -> vector<8x256xf32>
    %238 = arith.mulf %236, %237 : vector<8x256xf32>
    %cst_77 = arith.constant dense<0.000000e+00> : vector<8xf32>
    %239 = vector.multi_reduction <add>, %238, %cst_77 [1] : vector<8x256xf32> to vector<8xf32>
    %240 = vector.shape_cast %239 : vector<8xf32> to vector<8x1xf32>
    %241 = arith.mulf %236, %236 : vector<8x256xf32>
    %cst_78 = arith.constant dense<0.000000e+00> : vector<8xf32>
    %242 = vector.multi_reduction <add>, %241, %cst_78 [1] : vector<8x256xf32> to vector<8xf32>
    %243 = vector.shape_cast %242 : vector<8xf32> to vector<8x1xf32>
    %244 = arith.mulf %237, %237 : vector<8x256xf32>
    %cst_79 = arith.constant dense<0.000000e+00> : vector<8xf32>
    %245 = vector.multi_reduction <add>, %244, %cst_79 [1] : vector<8x256xf32> to vector<8xf32>
    %246 = vector.shape_cast %245 : vector<8xf32> to vector<8x1xf32>
    %cst_80 = arith.constant 1.000000e-16 : f32
    %247 = vector.broadcast %cst_80 : f32 to vector<8x1xf32>
    %248 = arith.maximumf %243, %247 : vector<8x1xf32>
    %249 = math.rsqrt %248 : vector<8x1xf32>
    %250 = arith.mulf %240, %249 : vector<8x1xf32>
    %cst_81 = arith.constant 1.000000e-16 : f32
    %251 = vector.broadcast %cst_81 : f32 to vector<8x1xf32>
    %252 = arith.maximumf %246, %251 : vector<8x1xf32>
    %253 = math.rsqrt %252 : vector<8x1xf32>
    %254 = arith.mulf %250, %253 : vector<8x1xf32>
    %255 = vector.shape_cast %254 : vector<8x1xf32> to vector<1x8x1xf32>
    %cst_82 = arith.constant dense<0.000000e+00> : vector<1xf32>
    %256 = vector.multi_reduction <add>, %255, %cst_82 [1, 2] : vector<1x8x1xf32> to vector<1xf32>
    %257 = vector.shape_cast %256 : vector<1xf32> to vector<1x1x1xf32>
    %258 = vector.extract %257[0, 0, 0] : f32 from vector<1x1x1xf32>
    %cst_83 = arith.constant 8.000000e+00 : f32
    %259 = arith.divf %258, %cst_83 : f32
    %cst_84 = arith.constant 0.000000e+00 : f32
    %260 = arith.subf %cst_84, %259 : f32
    %261 = vector.broadcast %260 : f32 to vector<1x1xf32>
    %c0_85 = arith.constant 0 : index
    %c0_86 = arith.constant 0 : index
    %262 = vector.load %arg15[%c0_85, %c0_86] : memref<1x1xf32, #tpu.memory_space<vmem>>, vector<1x1xf32>
    tpu.vector_store %arg15[%c0_85, %c0_86], %261 {strides = array<i32>} : memref<1x1xf32, #tpu.memory_space<vmem>>, vector<1x1xf32>,
    return
  }
}

</mosaic_0001>

<llo_original>
// kernel: simsiam_forward.1
$region0: #{simsiam_forward.1}
  #allocation0 [shape = 'u32[]', space=smem, size = 0x4, offset = 0x4, fixed_abs, tag = 'smem constant byte address 0x4 - core index']
  #allocation1 [shape = 'u32[144,128]{1,0:T(1,128)}', space=vmem, size = 0x12000, scoped, tag = 'internal scratch']
  %s0 = inlined_call_operand.vmem [shape: bf16[512,128], index: 0, kind: input, shape index: {}]
  %s1 = inlined_call_operand.vmem [shape: bf16[128,128], index: 1, kind: input, shape index: {}]
  %s2 = inlined_call_operand.vmem [shape: bf16[8,512], index: 2, kind: input, shape index: {}]
  %s3 = inlined_call_operand.vmem [shape: bf16[128,128], index: 3, kind: input, shape index: {}]
  %s4 = inlined_call_operand.vmem [shape: f32[1,128], index: 4, kind: input, shape index: {}]
  %s5 = inlined_call_operand.vmem [shape: f32[1,128], index: 5, kind: input, shape index: {}]
  %s6 = inlined_call_operand.vmem [shape: bf16[128,128], index: 6, kind: input, shape index: {}]
  %s7 = inlined_call_operand.vmem [shape: f32[1,128], index: 7, kind: input, shape index: {}]
  %s8 = inlined_call_operand.vmem [shape: f32[1,128], index: 8, kind: input, shape index: {}]
  %s9 = inlined_call_operand.vmem [shape: bf16[128,256], index: 9, kind: input, shape index: {}]
  %s10 = inlined_call_operand.vmem [shape: bf16[256,128], index: 10, kind: input, shape index: {}]
  %s11 = inlined_call_operand.vmem [shape: f32[1,128], index: 11, kind: input, shape index: {}]
  %s12 = inlined_call_operand.vmem [shape: f32[1,128], index: 12, kind: input, shape index: {}]
  %s13 = inlined_call_operand.vmem [shape: bf16[128,256], index: 13, kind: input, shape index: {}]
  %s14 = inlined_call_operand.vmem [shape: f32[1,256], index: 14, kind: input, shape index: {}]
  %s15 = inlined_call_operand.hbm [shape: f32[1,1], index: 15, kind: output, shape index: {}]
  %s16 = sld [smem:[#allocation0]]
  $region70: #{simsiam_forward.1} parent=0
    _
  %s18 = ssub.s32 1, %s16
  %s19 = scalar_select 0, %s18, %s16
  $region1: #{simsiam_forward.1} parent=0
    #allocation2 [shape = 'u8[512]{0}', space=vmem, size = 0x400, scoped, tag = 'output window, operand 0, single buffered']
    #allocation3 [shape = 's32[1]{0}', space=sflag, size = 0x4, scoped, tag = 'scoped memory for simsiam_forward.1']
    %20 = vsyncpa [#allocation3], 0
    // Predicated region
    $region2: #{simsiam_forward.1} parent=1 // pred_check
      _
    $region3: #{simsiam_forward.1} parent=1 // pred_check_branch
      %22 = sbr.rel (0) target = $region5
    $region4: #{simsiam_forward.1} parent=1 // pred_region
      _
    $region5: #{simsiam_forward.1} parent=1 // pred_fallthru
      _
    // Predicated region
    $region6: #{simsiam_forward.1} parent=1 // pred_check
      _
    $region7: #{simsiam_forward.1} parent=1 // pred_check_branch
      %24 = sbr.rel (0) target = $region9
    $region8: #{simsiam_forward.1} parent=1 // pred_region
      _
    $region9: #{simsiam_forward.1} parent=1 // pred_fallthru
      _
    // Predicated region
    $region10: #{simsiam_forward.1} parent=1 // pred_check
      _
    $region11: #{simsiam_forward.1} parent=1 // pred_check_branch
      %26 = sbr.rel (0) target = $region13
    $region12: #{simsiam_forward.1} parent=1 // pred_region
      _
    $region13: #{simsiam_forward.1} parent=1 // pred_fallthru
      _
    // Predicated region
    $region14: #{simsiam_forward.1} parent=1 // pred_check
      _
    $region15: #{simsiam_forward.1} parent=1 // pred_check_branch
      %28 = sbr.rel (0) target = $region17
    $region16: #{simsiam_forward.1} parent=1 // pred_region
      _
    $region17: #{simsiam_forward.1} parent=1 // pred_fallthru
      _
    // Predicated region
    $region18: #{simsiam_forward.1} parent=1 // pred_check
      _
    $region19: #{simsiam_forward.1} parent=1 // pred_check_branch
      %30 = sbr.rel (0) target = $region21
    $region20: #{simsiam_forward.1} parent=1 // pred_region
      _
    $region21: #{simsiam_forward.1} parent=1 // pred_fallthru
      _
    // Predicated region
    $region22: #{simsiam_forward.1} parent=1 // pred_check
      _
    $region23: #{simsiam_forward.1} parent=1 // pred_check_branch
      %32 = sbr.rel (0) target = $region25
    $region24: #{simsiam_forward.1} parent=1 // pred_region
      _
    $region25: #{simsiam_forward.1} parent=1 // pred_fallthru
      _
    // Predicated region
    $region26: #{simsiam_forward.1} parent=1 // pred_check
      _
    $region27: #{simsiam_forward.1} parent=1 // pred_check_branch
      %34 = sbr.rel (0) target = $region29
    $region28: #{simsiam_forward.1} parent=1 // pred_region
      _
    $region29: #{simsiam_forward.1} parent=1 // pred_fallthru
      _
    // Predicated region
    $region30: #{simsiam_forward.1} parent=1 // pred_check
      _
    $region31: #{simsiam_forward.1} parent=1 // pred_check_branch
      %36 = sbr.rel (0) target = $region33
    $region32: #{simsiam_forward.1} parent=1 // pred_region
      _
    $region33: #{simsiam_forward.1} parent=1 // pred_fallthru
      _
    // Predicated region
    $region34: #{simsiam_forward.1} parent=1 // pred_check
      _
    $region35: #{simsiam_forward.1} parent=1 // pred_check_branch
      %38 = sbr.rel (0) target = $region37
    $region36: #{simsiam_forward.1} parent=1 // pred_region
      _
    $region37: #{simsiam_forward.1} parent=1 // pred_fallthru
      _
    // Predicated region
    $region38: #{simsiam_forward.1} parent=1 // pred_check
      _
    $region39: #{simsiam_forward.1} parent=1 // pred_check_branch
      %40 = sbr.rel (0) target = $region41
    $region40: #{simsiam_forward.1} parent=1 // pred_region
      _
    $region41: #{simsiam_forward.1} parent=1 // pred_fallthru
      _
    // Predicated region
    $region42: #{simsiam_forward.1} parent=1 // pred_check
      _
    $region43: #{simsiam_forward.1} parent=1 // pred_check_branch
      %42 = sbr.rel (0) target = $region45
    $region44: #{simsiam_forward.1} parent=1 // pred_region
      _
    $region45: #{simsiam_forward.1} parent=1 // pred_fallthru
      _
    // Predicated region
    $region46: #{simsiam_forward.1} parent=1 // pred_check
      _
    $region47: #{simsiam_forward.1} parent=1 // pred_check_branch
      %44 = sbr.rel (0) target = $region49
    $region48: #{simsiam_forward.1} parent=1 // pred_region
      _
    $region49: #{simsiam_forward.1} parent=1 // pred_fallthru
      _
    // Predicated region
    $region50: #{simsiam_forward.1} parent=1 // pred_check
      _
    $region51: #{simsiam_forward.1} parent=1 // pred_check_branch
      %46 = sbr.rel (0) target = $region53
    $region52: #{simsiam_forward.1} parent=1 // pred_region
      _
    $region53: #{simsiam_forward.1} parent=1 // pred_fallthru
      _
    // Predicated region
    $region54: #{simsiam_forward.1} parent=1 // pred_check
      _
    $region55: #{simsiam_forward.1} parent=1 // pred_check_branch
      %48 = sbr.rel (0) target = $region57
    $region56: #{simsiam_forward.1} parent=1 // pred_region
      _
    $region57: #{simsiam_forward.1} parent=1 // pred_fallthru
      _
    // Predicated region
    $region58: #{simsiam_forward.1} parent=1 // pred_check
      _
    $region59: #{simsiam_forward.1} parent=1 // pred_check_branch
      %50 = sbr.rel (0) target = $region61
    $region60: #{simsiam_forward.1} parent=1 // pred_region
      _
    $region61: #{simsiam_forward.1} parent=1 // pred_fallthru
      _
    %v52 = vld [vmem:[%s0] sm:$0xf]
    %v53 = vld [vmem:[%s0 + $0x4] sm:$0xf]
    %v54 = vld [vmem:[%s0 + $0x8] sm:$0xf]
    %v55 = vld [vmem:[%s0 + $0xc] sm:$0xf]
    %v56 = vld [vmem:[%s0 + $0x10] sm:$0xf]
    %v57 = vld [vmem:[%s0 + $0x14] sm:$0xf]
    %v58 = vld [vmem:[%s0 + $0x18] sm:$0xf]
    %v59 = vld [vmem:[%s0 + $0x1c] sm:$0xf]
    %v60 = vld [vmem:[%s0 + $0x20] sm:$0xf]
    %v61 = vld [vmem:[%s0 + $0x24] sm:$0xf]
    %v62 = vld [vmem:[%s0 + $0x28] sm:$0xf]
    %v63 = vld [vmem:[%s0 + $0x2c] sm:$0xf]
    %v64 = vld [vmem:[%s0 + $0x30] sm:$0xf]
    %v65 = vld [vmem:[%s0 + $0x34] sm:$0xf]
    %v66 = vld [vmem:[%s0 + $0x38] sm:$0xf]
    %v67 = vld [vmem:[%s0 + $0x3c] sm:$0xf]
    %v68 = vld [vmem:[%s0 + $0x40] sm:$0xf]
    %v69 = vld [vmem:[%s0 + $0x44] sm:$0xf]
    %v70 = vld [vmem:[%s0 + $0x48] sm:$0xf]
    %v71 = vld [vmem:[%s0 + $0x4c] sm:$0xf]
    %v72 = vld [vmem:[%s0 + $0x50] sm:$0xf]
    %v73 = vld [vmem:[%s0 + $0x54] sm:$0xf]
    %v74 = vld [vmem:[%s0 + $0x58] sm:$0xf]
    %v75 = vld [vmem:[%s0 + $0x5c] sm:$0xf]
    %v76 = vld [vmem:[%s0 + $0x60] sm:$0xf]
    %v77 = vld [vmem:[%s0 + $0x64] sm:$0xf]
    %v78 = vld [vmem:[%s0 + $0x68] sm:$0xf]
    %v79 = vld [vmem:[%s0 + $0x6c] sm:$0xf]
    %v80 = vld [vmem:[%s0 + $0x70] sm:$0xf]
    %v81 = vld [vmem:[%s0 + $0x74] sm:$0xf]
    %v82 = vld [vmem:[%s0 + $0x78] sm:$0xf]
    %v83 = vld [vmem:[%s0 + $0x7c] sm:$0xf]
    %v84 = vld [vmem:[%s0 + $0x80] sm:$0xf]
    %v85 = vld [vmem:[%s0 + $0x84] sm:$0xf]
    %v86 = vld [vmem:[%s0 + $0x88] sm:$0xf]
    %v87 = vld [vmem:[%s0 + $0x8c] sm:$0xf]
    %v88 = vld [vmem:[%s0 + $0x90] sm:$0xf]
    %v89 = vld [vmem:[%s0 + $0x94] sm:$0xf]
    %v90 = vld [vmem:[%s0 + $0x98] sm:$0xf]
    %v91 = vld [vmem:[%s0 + $0x9c] sm:$0xf]
    %v92 = vld [vmem:[%s0 + $0xa0] sm:$0xf]
    %v93 = vld [vmem:[%s0 + $0xa4] sm:$0xf]
    %v94 = vld [vmem:[%s0 + $0xa8] sm:$0xf]
    %v95 = vld [vmem:[%s0 + $0xac] sm:$0xf]
    %v96 = vld [vmem:[%s0 + $0xb0] sm:$0xf]
    %v97 = vld [vmem:[%s0 + $0xb4] sm:$0xf]
    %v98 = vld [vmem:[%s0 + $0xb8] sm:$0xf]
    %v99 = vld [vmem:[%s0 + $0xbc] sm:$0xf]
    %v100 = vld [vmem:[%s0 + $0xc0] sm:$0xf]
    %v101 = vld [vmem:[%s0 + $0xc4] sm:$0xf]
    %v102 = vld [vmem:[%s0 + $0xc8] sm:$0xf]
    %v103 = vld [vmem:[%s0 + $0xcc] sm:$0xf]
    %v104 = vld [vmem:[%s0 + $0xd0] sm:$0xf]
    %v105 = vld [vmem:[%s0 + $0xd4] sm:$0xf]
    %v106 = vld [vmem:[%s0 + $0xd8] sm:$0xf]
    %v107 = vld [vmem:[%s0 + $0xdc] sm:$0xf]
    %v108 = vld [vmem:[%s0 + $0xe0] sm:$0xf]
    %v109 = vld [vmem:[%s0 + $0xe4] sm:$0xf]
    %v110 = vld [vmem:[%s0 + $0xe8] sm:$0xf]
    %v111 = vld [vmem:[%s0 + $0xec] sm:$0xf]
    %v112 = vld [vmem:[%s0 + $0xf0] sm:$0xf]
    %v113 = vld [vmem:[%s0 + $0xf4] sm:$0xf]
    %v114 = vld [vmem:[%s0 + $0xf8] sm:$0xf]
    %v115 = vld [vmem:[%s0 + $0xfc] sm:$0xf]
    %v116 = vld [vmem:[%s1] sm:$0xf]
    %v117 = vld [vmem:[%s1 + $0x4] sm:$0xf]
    %v118 = vld [vmem:[%s1 + $0x8] sm:$0xf]
    %v119 = vld [vmem:[%s1 + $0xc] sm:$0xf]
    %v120 = vld [vmem:[%s1 + $0x10] sm:$0xf]
    %v121 = vld [vmem:[%s1 + $0x14] sm:$0xf]
    %v122 = vld [vmem:[%s1 + $0x18] sm:$0xf]
    %v123 = vld [vmem:[%s1 + $0x1c] sm:$0xf]
    %v124 = vld [vmem:[%s1 + $0x20] sm:$0xf]
    %v125 = vld [vmem:[%s1 + $0x24] sm:$0xf]
    %v126 = vld [vmem:[%s1 + $0x28] sm:$0xf]
    %v127 = vld [vmem:[%s1 + $0x2c] sm:$0xf]
    %v128 = vld [vmem:[%s1 + $0x30] sm:$0xf]
    %v129 = vld [vmem:[%s1 + $0x34] sm:$0xf]
    %v130 = vld [vmem:[%s1 + $0x38] sm:$0xf]
    %v131 = vld [vmem:[%s1 + $0x3c] sm:$0xf]
    %v196 = vunpack.c.l.b16 %v52
    %v197 = vunpack.c.l.b16 %v53
    %v198 = vunpack.c.l.b16 %v54
    %v199 = vunpack.c.l.b16 %v55
    %v200 = vunpack.c.l.b16 %v56
    %v201 = vunpack.c.l.b16 %v57
    %v202 = vunpack.c.l.b16 %v58
    %v203 = vunpack.c.l.b16 %v59
    %v204 = vunpack.c.l.b16 %v60
    %v205 = vunpack.c.l.b16 %v61
    %v206 = vunpack.c.l.b16 %v62
    %v207 = vunpack.c.l.b16 %v63
    %v208 = vunpack.c.l.b16 %v64
    %v209 = vunpack.c.l.b16 %v65
    %v210 = vunpack.c.l.b16 %v66
    %v211 = vunpack.c.l.b16 %v67
    %v212 = vunpack.c.l.b16 %v68
    %v213 = vunpack.c.l.b16 %v69
    %v214 = vunpack.c.l.b16 %v70
    %v215 = vunpack.c.l.b16 %v71
    %v216 = vunpack.c.l.b16 %v72
    %v217 = vunpack.c.l.b16 %v73
    %v218 = vunpack.c.l.b16 %v74
    %v219 = vunpack.c.l.b16 %v75
    %v220 = vunpack.c.l.b16 %v76
    %v221 = vunpack.c.l.b16 %v77
    %v222 = vunpack.c.l.b16 %v78
    %v223 = vunpack.c.l.b16 %v79
    %v224 = vunpack.c.l.b16 %v80
    %v225 = vunpack.c.l.b16 %v81
    %v226 = vunpack.c.l.b16 %v82
    %v227 = vunpack.c.l.b16 %v83
    %v228 = vunpack.c.l.b16 %v84
    %v229 = vunpack.c.l.b16 %v85
    %v230 = vunpack.c.l.b16 %v86
    %v231 = vunpack.c.l.b16 %v87
    %v232 = vunpack.c.l.b16 %v88
    %v233 = vunpack.c.l.b16 %v89
    %v234 = vunpack.c.l.b16 %v90
    %v235 = vunpack.c.l.b16 %v91
    %v236 = vunpack.c.l.b16 %v92
    %v237 = vunpack.c.l.b16 %v93
    %v238 = vunpack.c.l.b16 %v94
    %v239 = vunpack.c.l.b16 %v95
    %v240 = vunpack.c.l.b16 %v96
    %v241 = vunpack.c.l.b16 %v97
    %v242 = vunpack.c.l.b16 %v98
    %v243 = vunpack.c.l.b16 %v99
    %v244 = vunpack.c.l.b16 %v100
    %v245 = vunpack.c.l.b16 %v101
    %v246 = vunpack.c.l.b16 %v102
    %v247 = vunpack.c.l.b16 %v103
    %v248 = vunpack.c.l.b16 %v104
    %v249 = vunpack.c.l.b16 %v105
    %v250 = vunpack.c.l.b16 %v106
    %v251 = vunpack.c.l.b16 %v107
    %v252 = vunpack.c.l.b16 %v108
    %v253 = vunpack.c.l.b16 %v109
    %v254 = vunpack.c.l.b16 %v110
    %v255 = vunpack.c.l.b16 %v111
    %v256 = vunpack.c.l.b16 %v112
    %v257 = vunpack.c.l.b16 %v113
    %v258 = vunpack.c.l.b16 %v114
    %v259 = vunpack.c.l.b16 %v115
    %v260 = vpack.c.b16 %v197, %v196
    %v261 = vpack.c.b16 %v199, %v198
    %v262 = vpack.c.b16 %v201, %v200
    %v263 = vpack.c.b16 %v203, %v202
    %v264 = vpack.c.b16 %v205, %v204
    %v265 = vpack.c.b16 %v207, %v206
    %v266 = vpack.c.b16 %v209, %v208
    %v267 = vpack.c.b16 %v211, %v210
    %v268 = vpack.c.b16 %v213, %v212
    %v269 = vpack.c.b16 %v215, %v214
    %v270 = vpack.c.b16 %v217, %v216
    %v271 = vpack.c.b16 %v219, %v218
    %v272 = vpack.c.b16 %v221, %v220
    %v273 = vpack.c.b16 %v223, %v222
    %v274 = vpack.c.b16 %v225, %v224
    %v275 = vpack.c.b16 %v227, %v226
    %v276 = vpack.c.b16 %v229, %v228
    %v277 = vpack.c.b16 %v231, %v230
    %v278 = vpack.c.b16 %v233, %v232
    %v279 = vpack.c.b16 %v235, %v234
    %v280 = vpack.c.b16 %v237, %v236
    %v281 = vpack.c.b16 %v239, %v238
    %v282 = vpack.c.b16 %v241, %v240
    %v283 = vpack.c.b16 %v243, %v242
    %v284 = vpack.c.b16 %v245, %v244
    %v285 = vpack.c.b16 %v247, %v246
    %v286 = vpack.c.b16 %v249, %v248
    %v287 = vpack.c.b16 %v251, %v250
    %v288 = vpack.c.b16 %v253, %v252
    %v289 = vpack.c.b16 %v255, %v254
    %v290 = vpack.c.b16 %v257, %v256
    %v291 = vpack.c.b16 %v259, %v258
    %v340 = vunpack.c.l.b16 %v116
    %v341 = vunpack.c.l.b16 %v117
    %v342 = vunpack.c.l.b16 %v118
    %v343 = vunpack.c.l.b16 %v119
    %v344 = vunpack.c.l.b16 %v120
    %v345 = vunpack.c.l.b16 %v121
    %v346 = vunpack.c.l.b16 %v122
    %v347 = vunpack.c.l.b16 %v123
    %v348 = vunpack.c.l.b16 %v124
    %v349 = vunpack.c.l.b16 %v125
    %v350 = vunpack.c.l.b16 %v126
    %v351 = vunpack.c.l.b16 %v127
    %v352 = vunpack.c.l.b16 %v128
    %v353 = vunpack.c.l.b16 %v129
    %v354 = vunpack.c.l.b16 %v130
    %v355 = vunpack.c.l.b16 %v131
    %v356 = vpack.c.b16 %v341, %v340
    %v357 = vpack.c.b16 %v343, %v342
    %v358 = vpack.c.b16 %v345, %v344
    %v359 = vpack.c.b16 %v347, %v346
    %v360 = vpack.c.b16 %v349, %v348
    %v361 = vpack.c.b16 %v351, %v350
    %v362 = vpack.c.b16 %v353, %v352
    %v363 = vpack.c.b16 %v355, %v354
    %372 = vmatprep.subr.bf16.mxu0 0
    %373 = vmatpush1.bf16.msra.mxu0 %v363
    %374 = vmatprep.subr.bf16.mxu0 0
    %375 = vmatpush1.bf16.msra.mxu0 %v362
    %376 = vmatprep.subr.bf16.mxu0 0
    %377 = vmatpush1.bf16.msra.mxu0 %v361
    %378 = vmatprep.subr.bf16.mxu0 0
    %379 = vmatpush1.bf16.msra.mxu0 %v360
    %380 = vmatprep.subr.bf16.mxu0 0
    %381 = vmatpush1.bf16.msra.mxu0 %v359
    %382 = vmatprep.subr.bf16.mxu0 0
    %383 = vmatpush1.bf16.msra.mxu0 %v358
    %384 = vmatprep.subr.bf16.mxu0 0
    %385 = vmatpush1.bf16.msra.mxu0 %v357
    %386 = vmatprep.subr.bf16.mxu0 0
    %387 = vmatpush1.bf16.msra.mxu0 %v356
    %388 = vmatprep.subr.bf16.mxu0 0
    %389 = vmatpush2.bf16.msra.mxu0 0
    %390 = vmatprep.subr.bf16.mxu0 0
    %391 = vmatpush2.bf16.msra.mxu0 0
    %392 = vmatprep.subr.bf16.mxu0 0
    %393 = vmatpush2.bf16.msra.mxu0 0
    %394 = vmatprep.subr.bf16.mxu0 0
    %395 = vmatpush2.bf16.msra.mxu0 0
    %396 = vmatprep.subr.bf16.mxu0 0
    %397 = vmatpush2.bf16.msra.mxu0 0
    %398 = vmatprep.subr.bf16.mxu0 0
    %399 = vmatpush2.bf16.msra.mxu0 0
    %400 = vmatprep.subr.bf16.mxu0 0
    %401 = vmatpush2.bf16.msra.mxu0 0
    %402 = vmatprep.subr.bf16.mxu0 0
    %403 = vmatpush2.bf16.msra.mxu0 0
    %404 = vmatprep.mubr.bf16.mxu0 0
    %405 = vmatmul.mubr.bf16.gmra.mxu0 %v260
    %v406 = vpop.f32.mrf.mxu0
    %v407 = vadd.f32 0.0, %v406
    %v408 = vpop.f32.mrf.mxu0
    %v409 = vpop.f32.mrf.mxu0
    %v410 = vadd.f32 0.0, %v409
    %v411 = vpop.f32.mrf.mxu0
    %412 = vmatprep.mubr.bf16.mxu0 0
    %413 = vmatmul.mubr.bf16.gmra.mxu0 %v261
    %v414 = vpop.f32.mrf.mxu0
    %v415 = vadd.f32 0.0, %v414
    %v416 = vpop.f32.mrf.mxu0
    %v417 = vpop.f32.mrf.mxu0
    %v418 = vadd.f32 0.0, %v417
    %v419 = vpop.f32.mrf.mxu0
    %420 = vmatprep.mubr.bf16.mxu0 0
    %421 = vmatmul.mubr.bf16.gmra.mxu0 %v262
    %v422 = vpop.f32.mrf.mxu0
    %v423 = vadd.f32 0.0, %v422
    %v424 = vpop.f32.mrf.mxu0
    %v425 = vpop.f32.mrf.mxu0
    %v426 = vadd.f32 0.0, %v425
    %v427 = vpop.f32.mrf.mxu0
    %428 = vmatprep.mubr.bf16.mxu0 0
    %429 = vmatmul.mubr.bf16.gmra.mxu0 %v263
    %v430 = vpop.f32.mrf.mxu0
    %v431 = vadd.f32 0.0, %v430
    %v432 = vpop.f32.mrf.mxu0
    %v433 = vpop.f32.mrf.mxu0
    %v434 = vadd.f32 0.0, %v433
    %v435 = vpop.f32.mrf.mxu0
    %436 = vmatprep.mubr.bf16.mxu0 0
    %437 = vmatmul.mubr.bf16.gmra.mxu0 %v264
    %v438 = vpop.f32.mrf.mxu0
    %v439 = vadd.f32 0.0, %v438
    %v440 = vpop.f32.mrf.mxu0
    %v441 = vpop.f32.mrf.mxu0
    %v442 = vadd.f32 0.0, %v441
    %v443 = vpop.f32.mrf.mxu0
    %444 = vmatprep.mubr.bf16.mxu0 0
    %445 = vmatmul.mubr.bf16.gmra.mxu0 %v265
    %v446 = vpop.f32.mrf.mxu0
    %v447 = vadd.f32 0.0, %v446
    %v448 = vpop.f32.mrf.mxu0
    %v449 = vpop.f32.mrf.mxu0
    %v450 = vadd.f32 0.0, %v449
    %v451 = vpop.f32.mrf.mxu0
    %452 = vmatprep.mubr.bf16.mxu0 0
    %453 = vmatmul.mubr.bf16.gmra.mxu0 %v266
    %v454 = vpop.f32.mrf.mxu0
    %v455 = vadd.f32 0.0, %v454
    %v456 = vpop.f32.mrf.mxu0
    %v457 = vpop.f32.mrf.mxu0
    %v458 = vadd.f32 0.0, %v457
    %v459 = vpop.f32.mrf.mxu0
    %460 = vmatprep.mubr.bf16.mxu0 0
    %461 = vmatmul.mubr.bf16.gmra.mxu0 %v267
    %v462 = vpop.f32.mrf.mxu0
    %v463 = vadd.f32 0.0, %v462
    %v464 = vpop.f32.mrf.mxu0
    %v465 = vpop.f32.mrf.mxu0
    %v466 = vadd.f32 0.0, %v465
    %v467 = vpop.f32.mrf.mxu0
    %468 = vmatprep.mubr.bf16.mxu0 0
    %469 = vmatmul.mubr.bf16.gmra.mxu0 %v268
    %v470 = vpop.f32.mrf.mxu0
    %v471 = vadd.f32 0.0, %v470
    %v472 = vpop.f32.mrf.mxu0
    %v473 = vpop.f32.mrf.mxu0
    %v474 = vadd.f32 0.0, %v473
    %v475 = vpop.f32.mrf.mxu0
    %476 = vmatprep.mubr.bf16.mxu0 0
    %477 = vmatmul.mubr.bf16.gmra.mxu0 %v269
    %v478 = vpop.f32.mrf.mxu0
    %v479 = vadd.f32 0.0, %v478
    %v480 = vpop.f32.mrf.mxu0
    %v481 = vpop.f32.mrf.mxu0
    %v482 = vadd.f32 0.0, %v481
    %v483 = vpop.f32.mrf.mxu0
    %484 = vmatprep.mubr.bf16.mxu0 0
    %485 = vmatmul.mubr.bf16.gmra.mxu0 %v270
    %v486 = vpop.f32.mrf.mxu0
    %v487 = vadd.f32 0.0, %v486
    %v488 = vpop.f32.mrf.mxu0
    %v489 = vpop.f32.mrf.mxu0
    %v490 = vadd.f32 0.0, %v489
    %v491 = vpop.f32.mrf.mxu0
    %492 = vmatprep.mubr.bf16.mxu0 0
    %493 = vmatmul.mubr.bf16.gmra.mxu0 %v271
    %v494 = vpop.f32.mrf.mxu0
    %v495 = vadd.f32 0.0, %v494
    %v496 = vpop.f32.mrf.mxu0
    %v497 = vpop.f32.mrf.mxu0
    %v498 = vadd.f32 0.0, %v497
    %v499 = vpop.f32.mrf.mxu0
    %500 = vmatprep.mubr.bf16.mxu0 0
    %501 = vmatmul.mubr.bf16.gmra.mxu0 %v272
    %v502 = vpop.f32.mrf.mxu0
    %v503 = vadd.f32 0.0, %v502
    %v504 = vpop.f32.mrf.mxu0
    %v505 = vpop.f32.mrf.mxu0
    %v506 = vadd.f32 0.0, %v505
    %v507 = vpop.f32.mrf.mxu0
    %508 = vmatprep.mubr.bf16.mxu0 0
    %509 = vmatmul.mubr.bf16.gmra.mxu0 %v273
    %v510 = vpop.f32.mrf.mxu0
    %v511 = vadd.f32 0.0, %v510
    %v512 = vpop.f32.mrf.mxu0
    %v513 = vpop.f32.mrf.mxu0
    %v514 = vadd.f32 0.0, %v513
    %v515 = vpop.f32.mrf.mxu0
    %516 = vmatprep.mubr.bf16.mxu0 0
    %517 = vmatmul.mubr.bf16.gmra.mxu0 %v274
    %v518 = vpop.f32.mrf.mxu0
    %v519 = vadd.f32 0.0, %v518
    %v520 = vpop.f32.mrf.mxu0
    %v521 = vpop.f32.mrf.mxu0
    %v522 = vadd.f32 0.0, %v521
    %v523 = vpop.f32.mrf.mxu0
    %524 = vmatprep.mubr.bf16.mxu0 0
    %525 = vmatmul.mubr.bf16.gmra.mxu0 %v275
    %v526 = vpop.f32.mrf.mxu0
    %v527 = vadd.f32 0.0, %v526
    %v528 = vpop.f32.mrf.mxu0
    %v529 = vpop.f32.mrf.mxu0
    %v530 = vadd.f32 0.0, %v529
    %v531 = vpop.f32.mrf.mxu0
    %532 = vmatprep.mubr.bf16.mxu0 0
    %533 = vmatmul.mubr.bf16.gmra.mxu0 %v276
    %v534 = vpop.f32.mrf.mxu0
    %v535 = vadd.f32 0.0, %v534
    %v536 = vpop.f32.mrf.mxu0
    %v537 = vpop.f32.mrf.mxu0
    %v538 = vadd.f32 0.0, %v537
    %v539 = vpop.f32.mrf.mxu0
    %540 = vmatprep.mubr.bf16.mxu0 0
    %541 = vmatmul.mubr.bf16.gmra.mxu0 %v277
    %v542 = vpop.f32.mrf.mxu0
    %v543 = vadd.f32 0.0, %v542
    %v544 = vpop.f32.mrf.mxu0
    %v545 = vpop.f32.mrf.mxu0
    %v546 = vadd.f32 0.0, %v545
    %v547 = vpop.f32.mrf.mxu0
    %548 = vmatprep.mubr.bf16.mxu0 0
    %549 = vmatmul.mubr.bf16.gmra.mxu0 %v278
    %v550 = vpop.f32.mrf.mxu0
    %v551 = vadd.f32 0.0, %v550
    %v552 = vpop.f32.mrf.mxu0
    %v553 = vpop.f32.mrf.mxu0
    %v554 = vadd.f32 0.0, %v553
    %v555 = vpop.f32.mrf.mxu0
    %556 = vmatprep.mubr.bf16.mxu0 0
    %557 = vmatmul.mubr.bf16.gmra.mxu0 %v279
    %v558 = vpop.f32.mrf.mxu0
    %v559 = vadd.f32 0.0, %v558
    %v560 = vpop.f32.mrf.mxu0
    %v561 = vpop.f32.mrf.mxu0
    %v562 = vadd.f32 0.0, %v561
    %v563 = vpop.f32.mrf.mxu0
    %564 = vmatprep.mubr.bf16.mxu0 0
    %565 = vmatmul.mubr.bf16.gmra.mxu0 %v280
    %v566 = vpop.f32.mrf.mxu0
    %v567 = vadd.f32 0.0, %v566
    %v568 = vpop.f32.mrf.mxu0
    %v569 = vpop.f32.mrf.mxu0
    %v570 = vadd.f32 0.0, %v569
    %v571 = vpop.f32.mrf.mxu0
    %572 = vmatprep.mubr.bf16.mxu0 0
    %573 = vmatmul.mubr.bf16.gmra.mxu0 %v281
    %v574 = vpop.f32.mrf.mxu0
    %v575 = vadd.f32 0.0, %v574
    %v576 = vpop.f32.mrf.mxu0
    %v577 = vpop.f32.mrf.mxu0
    %v578 = vadd.f32 0.0, %v577
    %v579 = vpop.f32.mrf.mxu0
    %580 = vmatprep.mubr.bf16.mxu0 0
    %581 = vmatmul.mubr.bf16.gmra.mxu0 %v282
    %v582 = vpop.f32.mrf.mxu0
    %v583 = vadd.f32 0.0, %v582
    %v584 = vpop.f32.mrf.mxu0
    %v585 = vpop.f32.mrf.mxu0
    %v586 = vadd.f32 0.0, %v585
    %v587 = vpop.f32.mrf.mxu0
    %588 = vmatprep.mubr.bf16.mxu0 0
    %589 = vmatmul.mubr.bf16.gmra.mxu0 %v283
    %v590 = vpop.f32.mrf.mxu0
    %v591 = vadd.f32 0.0, %v590
    %v592 = vpop.f32.mrf.mxu0
    %v593 = vpop.f32.mrf.mxu0
    %v594 = vadd.f32 0.0, %v593
    %v595 = vpop.f32.mrf.mxu0
    %596 = vmatprep.mubr.bf16.mxu0 0
    %597 = vmatmul.mubr.bf16.gmra.mxu0 %v284
    %v598 = vpop.f32.mrf.mxu0
    %v599 = vadd.f32 0.0, %v598
    %v600 = vpop.f32.mrf.mxu0
    %v601 = vpop.f32.mrf.mxu0
    %v602 = vadd.f32 0.0, %v601
    %v603 = vpop.f32.mrf.mxu0
    %604 = vmatprep.mubr.bf16.mxu0 0
    %605 = vmatmul.mubr.bf16.gmra.mxu0 %v285
    %v606 = vpop.f32.mrf.mxu0
    %v607 = vadd.f32 0.0, %v606
    %v608 = vpop.f32.mrf.mxu0
    %v609 = vpop.f32.mrf.mxu0
    %v610 = vadd.f32 0.0, %v609
    %v611 = vpop.f32.mrf.mxu0
    %612 = vmatprep.mubr.bf16.mxu0 0
    %613 = vmatmul.mubr.bf16.gmra.mxu0 %v286
    %v614 = vpop.f32.mrf.mxu0
    %v615 = vadd.f32 0.0, %v614
    %v616 = vpop.f32.mrf.mxu0
    %v617 = vpop.f32.mrf.mxu0
    %v618 = vadd.f32 0.0, %v617
    %v619 = vpop.f32.mrf.mxu0
    %620 = vmatprep.mubr.bf16.mxu0 0
    %621 = vmatmul.mubr.bf16.gmra.mxu0 %v287
    %v622 = vpop.f32.mrf.mxu0
    %v623 = vadd.f32 0.0, %v622
    %v624 = vpop.f32.mrf.mxu0
    %v625 = vpop.f32.mrf.mxu0
    %v626 = vadd.f32 0.0, %v625
    %v627 = vpop.f32.mrf.mxu0
    %628 = vmatprep.mubr.bf16.mxu0 0
    %629 = vmatmul.mubr.bf16.gmra.mxu0 %v288
    %v630 = vpop.f32.mrf.mxu0
    %v631 = vadd.f32 0.0, %v630
    %v632 = vpop.f32.mrf.mxu0
    %v633 = vpop.f32.mrf.mxu0
    %v634 = vadd.f32 0.0, %v633
    %v635 = vpop.f32.mrf.mxu0
    %636 = vmatprep.mubr.bf16.mxu0 0
    %637 = vmatmul.mubr.bf16.gmra.mxu0 %v289
    %v638 = vpop.f32.mrf.mxu0
    %v639 = vadd.f32 0.0, %v638
    %v640 = vpop.f32.mrf.mxu0
    %v641 = vpop.f32.mrf.mxu0
    %v642 = vadd.f32 0.0, %v641
    %v643 = vpop.f32.mrf.mxu0
    %644 = vmatprep.mubr.bf16.mxu0 0
    %645 = vmatmul.mubr.bf16.gmra.mxu0 %v290
    %v646 = vpop.f32.mrf.mxu0
    %v647 = vadd.f32 0.0, %v646
    %v648 = vpop.f32.mrf.mxu0
    %v649 = vpop.f32.mrf.mxu0
    %v650 = vadd.f32 0.0, %v649
    %v651 = vpop.f32.mrf.mxu0
    %652 = vmatprep.mubr.bf16.mxu0 0
    %653 = vmatmul.mubr.bf16.gmra.mxu0 %v291
    %v654 = vpop.f32.mrf.mxu0
    %v655 = vadd.f32 0.0, %v654
    %v656 = vpop.f32.mrf.mxu0
    %v657 = vpop.f32.mrf.mxu0
    %v658 = vadd.f32 0.0, %v657
    %v659 = vpop.f32.mrf.mxu0
    %660 = vdwg.mxu0
    %v661 = vmax.f32 %v407, 0.0
    %v662 = vmax.f32 %v410, 0.0
    %v663 = vmax.f32 %v415, 0.0
    %v664 = vmax.f32 %v418, 0.0
    %v665 = vmax.f32 %v423, 0.0
    %v666 = vmax.f32 %v426, 0.0
    %v667 = vmax.f32 %v431, 0.0
    %v668 = vmax.f32 %v434, 0.0
    %v669 = vmax.f32 %v439, 0.0
    %v670 = vmax.f32 %v442, 0.0
    %v671 = vmax.f32 %v447, 0.0
    %v672 = vmax.f32 %v450, 0.0
    %v673 = vmax.f32 %v455, 0.0
    %v674 = vmax.f32 %v458, 0.0
    %v675 = vmax.f32 %v463, 0.0
    %v676 = vmax.f32 %v466, 0.0
    %v677 = vmax.f32 %v471, 0.0
    %v678 = vmax.f32 %v474, 0.0
    %v679 = vmax.f32 %v479, 0.0
    %v680 = vmax.f32 %v482, 0.0
    %v681 = vmax.f32 %v487, 0.0
    %v682 = vmax.f32 %v490, 0.0
    %v683 = vmax.f32 %v495, 0.0
    %v684 = vmax.f32 %v498, 0.0
    %v685 = vmax.f32 %v503, 0.0
    %v686 = vmax.f32 %v506, 0.0
    %v687 = vmax.f32 %v511, 0.0
    %v688 = vmax.f32 %v514, 0.0
    %v689 = vmax.f32 %v519, 0.0
    %v690 = vmax.f32 %v522, 0.0
    %v691 = vmax.f32 %v527, 0.0
    %v692 = vmax.f32 %v530, 0.0
    %v693 = vmax.f32 %v535, 0.0
    %v694 = vmax.f32 %v538, 0.0
    %v695 = vmax.f32 %v543, 0.0
    %v696 = vmax.f32 %v546, 0.0
    %v697 = vmax.f32 %v551, 0.0
    %v698 = vmax.f32 %v554, 0.0
    %v699 = vmax.f32 %v559, 0.0
    %v700 = vmax.f32 %v562, 0.0
    %v701 = vmax.f32 %v567, 0.0
    %v702 = vmax.f32 %v570, 0.0
    %v703 = vmax.f32 %v575, 0.0
    %v704 = vmax.f32 %v578, 0.0
    %v705 = vmax.f32 %v583, 0.0
    %v706 = vmax.f32 %v586, 0.0
    %v707 = vmax.f32 %v591, 0.0
    %v708 = vmax.f32 %v594, 0.0
    %v709 = vmax.f32 %v599, 0.0
    %v710 = vmax.f32 %v602, 0.0
    %v711 = vmax.f32 %v607, 0.0
    %v712 = vmax.f32 %v610, 0.0
    %v713 = vmax.f32 %v615, 0.0
    %v714 = vmax.f32 %v618, 0.0
    %v715 = vmax.f32 %v623, 0.0
    %v716 = vmax.f32 %v626, 0.0
    %v717 = vmax.f32 %v631, 0.0
    %v718 = vmax.f32 %v634, 0.0
    %v719 = vmax.f32 %v639, 0.0
    %v720 = vmax.f32 %v642, 0.0
    %v721 = vmax.f32 %v647, 0.0
    %v722 = vmax.f32 %v650, 0.0
    %v723 = vmax.f32 %v655, 0.0
    %v724 = vmax.f32 %v658, 0.0
    %v725 = vld [vmem:[%s2] sm:$0xff]
    %v726 = vld [vmem:[%s2 + $0x8] sm:$0xff]
    %v727 = vpack.c.bf16 %v662, %v661
    %v728 = vpack.c.bf16 %v664, %v663
    %v729 = vpack.c.bf16 %v666, %v665
    %v730 = vpack.c.bf16 %v668, %v667
    %v731 = vpack.c.bf16 %v670, %v669
    %v732 = vpack.c.bf16 %v672, %v671
    %v733 = vpack.c.bf16 %v674, %v673
    %v734 = vpack.c.bf16 %v676, %v675
    %v735 = vpack.c.bf16 %v678, %v677
    %v736 = vpack.c.bf16 %v680, %v679
    %v737 = vpack.c.bf16 %v682, %v681
    %v738 = vpack.c.bf16 %v684, %v683
    %v739 = vpack.c.bf16 %v686, %v685
    %v740 = vpack.c.bf16 %v688, %v687
    %v741 = vpack.c.bf16 %v690, %v689
    %v742 = vpack.c.bf16 %v692, %v691
    %v743 = vpack.c.bf16 %v694, %v693
    %v744 = vpack.c.bf16 %v696, %v695
    %v745 = vpack.c.bf16 %v698, %v697
    %v746 = vpack.c.bf16 %v700, %v699
    %v747 = vpack.c.bf16 %v702, %v701
    %v748 = vpack.c.bf16 %v704, %v703
    %v749 = vpack.c.bf16 %v706, %v705
    %v750 = vpack.c.bf16 %v708, %v707
    %v751 = vpack.c.bf16 %v710, %v709
    %v752 = vpack.c.bf16 %v712, %v711
    %v753 = vpack.c.bf16 %v714, %v713
    %v754 = vpack.c.bf16 %v716, %v715
    %v755 = vpack.c.bf16 %v718, %v717
    %v756 = vpack.c.bf16 %v720, %v719
    %v757 = vpack.c.bf16 %v722, %v721
    %v758 = vpack.c.bf16 %v724, %v723
    %v761 = vunpack.c.l.b16 %v725
    %v762 = vunpack.c.h.b16 %v725
    %v763 = vunpack.c.l.b16 %v726
    %v764 = vunpack.c.h.b16 %v726
    %v765 = vpack.c.b16 %v761, %v761
    %v766 = vpack.c.b16 %v762, %v762
    %v767 = vpack.c.b16 %v763, %v763
    %v768 = vpack.c.b16 %v764, %v764
    %773 = vmatprep.subr.bf16.mxu0 0
    %774 = vmatpush1.bf16.msra.mxu0 %v734
    %775 = vmatprep.subr.bf16.mxu0 0
    %776 = vmatpush1.bf16.msra.mxu0 %v733
    %777 = vmatprep.subr.bf16.mxu0 0
    %778 = vmatpush1.bf16.msra.mxu0 %v732
    %779 = vmatprep.subr.bf16.mxu0 0
    %780 = vmatpush1.bf16.msra.mxu0 %v731
    %781 = vmatprep.subr.bf16.mxu0 0
    %782 = vmatpush1.bf16.msra.mxu0 %v730
    %783 = vmatprep.subr.bf16.mxu0 0
    %784 = vmatpush1.bf16.msra.mxu0 %v729
    %785 = vmatprep.subr.bf16.mxu0 0
    %786 = vmatpush1.bf16.msra.mxu0 %v728
    %787 = vmatprep.subr.bf16.mxu0 0
    %788 = vmatpush1.bf16.msra.mxu0 %v727
    %789 = vmatprep.subr.bf16.mxu0 0
    %790 = vmatpush2.bf16.msra.mxu0 %v742
    %791 = vmatprep.subr.bf16.mxu0 0
    %792 = vmatpush2.bf16.msra.mxu0 %v741
    %793 = vmatprep.subr.bf16.mxu0 0
    %794 = vmatpush2.bf16.msra.mxu0 %v740
    %795 = vmatprep.subr.bf16.mxu0 0
    %796 = vmatpush2.bf16.msra.mxu0 %v739
    %797 = vmatprep.subr.bf16.mxu0 0
    %798 = vmatpush2.bf16.msra.mxu0 %v738
    %799 = vmatprep.subr.bf16.mxu0 0
    %800 = vmatpush2.bf16.msra.mxu0 %v737
    %801 = vmatprep.subr.bf16.mxu0 0
    %802 = vmatpush2.bf16.msra.mxu0 %v736
    %803 = vmatprep.subr.bf16.mxu0 0
    %804 = vmatpush2.bf16.msra.mxu0 %v735
    %805 = vmatprep.mubr.bf16.mxu0 %v766
    %806 = vmatmul.mubr.bf16.gmra.mxu0 %v765
    %v807 = vpop.f32.mrf.mxu0
    %v808 = vadd.f32 0.0, %v807
    %v809 = vpop.f32.mrf.mxu0
    %v810 = vpop.f32.mrf.mxu0
    %v811 = vpop.f32.mrf.mxu0
    %812 = vdwg.mxu0
    %813 = vmatprep.subr.bf16.mxu0 0
    %814 = vmatpush1.bf16.msra.mxu0 %v750
    %815 = vmatprep.subr.bf16.mxu0 0
    %816 = vmatpush1.bf16.msra.mxu0 %v749
    %817 = vmatprep.subr.bf16.mxu0 0
    %818 = vmatpush1.bf16.msra.mxu0 %v748
    %819 = vmatprep.subr.bf16.mxu0 0
    %820 = vmatpush1.bf16.msra.mxu0 %v747
    %821 = vmatprep.subr.bf16.mxu0 0
    %822 = vmatpush1.bf16.msra.mxu0 %v746
    %823 = vmatprep.subr.bf16.mxu0 0
    %824 = vmatpush1.bf16.msra.mxu0 %v745
    %825 = vmatprep.subr.bf16.mxu0 0
    %826 = vmatpush1.bf16.msra.mxu0 %v744
    %827 = vmatprep.subr.bf16.mxu0 0
    %828 = vmatpush1.bf16.msra.mxu0 %v743
    %829 = vmatprep.subr.bf16.mxu0 0
    %830 = vmatpush2.bf16.msra.mxu0 %v758
    %831 = vmatprep.subr.bf16.mxu0 0
    %832 = vmatpush2.bf16.msra.mxu0 %v757
    %833 = vmatprep.subr.bf16.mxu0 0
    %834 = vmatpush2.bf16.msra.mxu0 %v756
    %835 = vmatprep.subr.bf16.mxu0 0
    %836 = vmatpush2.bf16.msra.mxu0 %v755
    %837 = vmatprep.subr.bf16.mxu0 0
    %838 = vmatpush2.bf16.msra.mxu0 %v754
    %839 = vmatprep.subr.bf16.mxu0 0
    %840 = vmatpush2.bf16.msra.mxu0 %v753
    %841 = vmatprep.subr.bf16.mxu0 0
    %842 = vmatpush2.bf16.msra.mxu0 %v752
    %843 = vmatprep.subr.bf16.mxu0 0
    %844 = vmatpush2.bf16.msra.mxu0 %v751
    %845 = vmatprep.mubr.bf16.mxu0 %v768
    %846 = vmatmul.mubr.bf16.gmra.mxu0 %v767
    %v847 = vpop.f32.mrf.mxu0
    %v848 = vadd.f32 %v808, %v847
    %v849 = vpop.f32.mrf.mxu0
    %v850 = vpop.f32.mrf.mxu0
    %v851 = vpop.f32.mrf.mxu0
    %852 = vdwg.mxu0
    %v853 = vlaneseq
    %v854 = vshrl.u32 %v853, 7
    %vm855 = vcmp.lt.s32.totalorder %v854, 4
    %v856 = vsel %vm855, 1, 0
    %v857 = vcvt.s32.f32 %v856
    %v858 = vsub.f32 1.0, %v857
    %v859 = vpack.c.bf16 %v848, %v848
    %v860 = vld [vmem:[%s3] sm:$0xf]
    %v861 = vld [vmem:[%s3 + $0x4] sm:$0xf]
    %v862 = vld [vmem:[%s3 + $0x8] sm:$0xf]
    %v863 = vld [vmem:[%s3 + $0xc] sm:$0xf]
    %v864 = vld [vmem:[%s3 + $0x10] sm:$0xf]
    %v865 = vld [vmem:[%s3 + $0x14] sm:$0xf]
    %v866 = vld [vmem:[%s3 + $0x18] sm:$0xf]
    %v867 = vld [vmem:[%s3 + $0x1c] sm:$0xf]
    %v868 = vld [vmem:[%s3 + $0x20] sm:$0xf]
    %v869 = vld [vmem:[%s3 + $0x24] sm:$0xf]
    %v870 = vld [vmem:[%s3 + $0x28] sm:$0xf]
    %v871 = vld [vmem:[%s3 + $0x2c] sm:$0xf]
    %v872 = vld [vmem:[%s3 + $0x30] sm:$0xf]
    %v873 = vld [vmem:[%s3 + $0x34] sm:$0xf]
    %v874 = vld [vmem:[%s3 + $0x38] sm:$0xf]
    %v875 = vld [vmem:[%s3 + $0x3c] sm:$0xf]
    %v892 = vunpack.c.l.b16 %v860
    %v893 = vunpack.c.l.b16 %v861
    %v894 = vunpack.c.l.b16 %v862
    %v895 = vunpack.c.l.b16 %v863
    %v896 = vunpack.c.l.b16 %v864
    %v897 = vunpack.c.l.b16 %v865
    %v898 = vunpack.c.l.b16 %v866
    %v899 = vunpack.c.l.b16 %v867
    %v900 = vunpack.c.l.b16 %v868
    %v901 = vunpack.c.l.b16 %v869
    %v902 = vunpack.c.l.b16 %v870
    %v903 = vunpack.c.l.b16 %v871
    %v904 = vunpack.c.l.b16 %v872
    %v905 = vunpack.c.l.b16 %v873
    %v906 = vunpack.c.l.b16 %v874
    %v907 = vunpack.c.l.b16 %v875
    %v908 = vpack.c.b16 %v893, %v892
    %v909 = vpack.c.b16 %v895, %v894
    %v910 = vpack.c.b16 %v897, %v896
    %v911 = vpack.c.b16 %v899, %v898
    %v912 = vpack.c.b16 %v901, %v900
    %v913 = vpack.c.b16 %v903, %v902
    %v914 = vpack.c.b16 %v905, %v904
    %v915 = vpack.c.b16 %v907, %v906
    %924 = vmatprep.subr.bf16.mxu0 0
    %925 = vmatpush1.bf16.msra.mxu0 %v915
    %926 = vmatprep.subr.bf16.mxu0 0
    %927 = vmatpush1.bf16.msra.mxu0 %v914
    %928 = vmatprep.subr.bf16.mxu0 0
    %929 = vmatpush1.bf16.msra.mxu0 %v913
    %930 = vmatprep.subr.bf16.mxu0 0
    %931 = vmatpush1.bf16.msra.mxu0 %v912
    %932 = vmatprep.subr.bf16.mxu0 0
    %933 = vmatpush1.bf16.msra.mxu0 %v911
    %934 = vmatprep.subr.bf16.mxu0 0
    %935 = vmatpush1.bf16.msra.mxu0 %v910
    %936 = vmatprep.subr.bf16.mxu0 0
    %937 = vmatpush1.bf16.msra.mxu0 %v909
    %938 = vmatprep.subr.bf16.mxu0 0
    %939 = vmatpush1.bf16.msra.mxu0 %v908
    %940 = vmatprep.subr.bf16.mxu0 0
    %941 = vmatpush2.bf16.msra.mxu0 0
    %942 = vmatprep.subr.bf16.mxu0 0
    %943 = vmatpush2.bf16.msra.mxu0 0
    %944 = vmatprep.subr.bf16.mxu0 0
    %945 = vmatpush2.bf16.msra.mxu0 0
    %946 = vmatprep.subr.bf16.mxu0 0
    %947 = vmatpush2.bf16.msra.mxu0 0
    %948 = vmatprep.subr.bf16.mxu0 0
    %949 = vmatpush2.bf16.msra.mxu0 0
    %950 = vmatprep.subr.bf16.mxu0 0
    %951 = vmatpush2.bf16.msra.mxu0 0
    %952 = vmatprep.subr.bf16.mxu0 0
    %953 = vmatpush2.bf16.msra.mxu0 0
    %954 = vmatprep.subr.bf16.mxu0 0
    %955 = vmatpush2.bf16.msra.mxu0 0
    %956 = vmatprep.mubr.bf16.mxu0 0
    %957 = vmatmul.mubr.bf16.gmra.mxu0 %v859
    %v958 = vpop.f32.mrf.mxu0
    %v959 = vadd.f32 0.0, %v958
    %v960 = vpop.f32.mrf.mxu0
    %v961 = vpop.f32.mrf.mxu0
    %v962 = vpop.f32.mrf.mxu0
    %963 = vdwg.mxu0
    %v964 = vmul.f32 %v959, %v857
    %v965 = vrot.slane %v964, 4
    %v966 = vadd.f32 %v964, %v965
    %v967 = vrot.slane %v966, 2
    %v968 = vadd.f32 %v966, %v967
    %v969 = vrot.slane %v968, 1
    %v970 = vadd.f32 %v968, %v969
    %v971 = vmul.f32 %v970, 0.25
    %v972 = vmul.f32 %v959, %v858
    %v973 = vrot.slane %v972, 4
    %v974 = vadd.f32 %v972, %v973
    %v975 = vrot.slane %v974, 2
    %v976 = vadd.f32 %v974, %v975
    %v977 = vrot.slane %v976, 1
    %v978 = vadd.f32 %v976, %v977
    %v979 = vmul.f32 %v978, 0.25
    %v980 = vmul.f32 %v857, %v971
    %v981 = vmul.f32 %v858, %v979
    %v982 = vadd.f32 %v980, %v981
    %v983 = vsub.f32 %v959, %v982
    %v984 = vmul.f32 %v983, %v983
    %v985 = vmul.f32 %v984, %v857
    %v986 = vrot.slane %v985, 4
    %v987 = vadd.f32 %v985, %v986
    %v988 = vrot.slane %v987, 2
    %v989 = vadd.f32 %v987, %v988
    %v990 = vrot.slane %v989, 1
    %v991 = vadd.f32 %v989, %v990
    %v992 = vmul.f32 %v991, 0.25
    %v993 = vmul.f32 %v984, %v858
    %v994 = vrot.slane %v993, 4
    %v995 = vadd.f32 %v993, %v994
    %v996 = vrot.slane %v995, 2
    %v997 = vadd.f32 %v995, %v996
    %v998 = vrot.slane %v997, 1
    %v999 = vadd.f32 %v997, %v998
    %v1000 = vmul.f32 %v999, 0.25
    %v1001 = vmul.f32 %v857, %v992
    %v1002 = vmul.f32 %v858, %v1000
    %v1003 = vadd.f32 %v1001, %v1002
    %v1004 = vadd.f32 %v1003, 1e-05
    %v1005 = vrsqrt.pop %v1004
    %v1006 = vmul.f32 %v983, %v1005
    %v1007 = vld [vmem:[%s4] sm:$0x1]
    %v1009 = vlaneseq
    %v1010 = vshrl.u32 %v1009, 7
    %v1011 = vsub.s32 0, %v1010
    %v1012 = vrot.slane %v1007, %v1011
    %v1014 = vmul.f32 %v1006, %v1012
    %v1015 = vld [vmem:[%s5] sm:$0x1]
    %v1017 = vlaneseq
    %v1018 = vshrl.u32 %v1017, 7
    %v1019 = vsub.s32 0, %v1018
    %v1020 = vrot.slane %v1015, %v1019
    %v1022 = vadd.f32 %v1014, %v1020
    %v1023 = vmax.f32 %v1022, 0.0
    %v1024 = vpack.c.bf16 %v1023, %v1023
    %v1025 = vld [vmem:[%s6] sm:$0xf]
    %v1026 = vld [vmem:[%s6 + $0x4] sm:$0xf]
    %v1027 = vld [vmem:[%s6 + $0x8] sm:$0xf]
    %v1028 = vld [vmem:[%s6 + $0xc] sm:$0xf]
    %v1029 = vld [vmem:[%s6 + $0x10] sm:$0xf]
    %v1030 = vld [vmem:[%s6 + $0x14] sm:$0xf]
    %v1031 = vld [vmem:[%s6 + $0x18] sm:$0xf]
    %v1032 = vld [vmem:[%s6 + $0x1c] sm:$0xf]
    %v1033 = vld [vmem:[%s6 + $0x20] sm:$0xf]
    %v1034 = vld [vmem:[%s6 + $0x24] sm:$0xf]
    %v1035 = vld [vmem:[%s6 + $0x28] sm:$0xf]
    %v1036 = vld [vmem:[%s6 + $0x2c] sm:$0xf]
    %v1037 = vld [vmem:[%s6 + $0x30] sm:$0xf]
    %v1038 = vld [vmem:[%s6 + $0x34] sm:$0xf]
    %v1039 = vld [vmem:[%s6 + $0x38] sm:$0xf]
    %v1040 = vld [vmem:[%s6 + $0x3c] sm:$0xf]
    %v1057 = vunpack.c.l.b16 %v1025
    %v1058 = vunpack.c.l.b16 %v1026
    %v1059 = vunpack.c.l.b16 %v1027
    %v1060 = vunpack.c.l.b16 %v1028
    %v1061 = vunpack.c.l.b16 %v1029
    %v1062 = vunpack.c.l.b16 %v1030
    %v1063 = vunpack.c.l.b16 %v1031
    %v1064 = vunpack.c.l.b16 %v1032
    %v1065 = vunpack.c.l.b16 %v1033
    %v1066 = vunpack.c.l.b16 %v1034
    %v1067 = vunpack.c.l.b16 %v1035
    %v1068 = vunpack.c.l.b16 %v1036
    %v1069 = vunpack.c.l.b16 %v1037
    %v1070 = vunpack.c.l.b16 %v1038
    %v1071 = vunpack.c.l.b16 %v1039
    %v1072 = vunpack.c.l.b16 %v1040
    %v1073 = vpack.c.b16 %v1058, %v1057
    %v1074 = vpack.c.b16 %v1060, %v1059
    %v1075 = vpack.c.b16 %v1062, %v1061
    %v1076 = vpack.c.b16 %v1064, %v1063
    %v1077 = vpack.c.b16 %v1066, %v1065
    %v1078 = vpack.c.b16 %v1068, %v1067
    %v1079 = vpack.c.b16 %v1070, %v1069
    %v1080 = vpack.c.b16 %v1072, %v1071
    %1089 = vmatprep.subr.bf16.mxu0 0
    %1090 = vmatpush1.bf16.msra.mxu0 %v1080
    %1091 = vmatprep.subr.bf16.mxu0 0
    %1092 = vmatpush1.bf16.msra.mxu0 %v1079
    %1093 = vmatprep.subr.bf16.mxu0 0
    %1094 = vmatpush1.bf16.msra.mxu0 %v1078
    %1095 = vmatprep.subr.bf16.mxu0 0
    %1096 = vmatpush1.bf16.msra.mxu0 %v1077
    %1097 = vmatprep.subr.bf16.mxu0 0
    %1098 = vmatpush1.bf16.msra.mxu0 %v1076
    %1099 = vmatprep.subr.bf16.mxu0 0
    %1100 = vmatpush1.bf16.msra.mxu0 %v1075
    %1101 = vmatprep.subr.bf16.mxu0 0
    %1102 = vmatpush1.bf16.msra.mxu0 %v1074
    %1103 = vmatprep.subr.bf16.mxu0 0
    %1104 = vmatpush1.bf16.msra.mxu0 %v1073
    %1105 = vmatprep.subr.bf16.mxu0 0
    %1106 = vmatpush2.bf16.msra.mxu0 0
    %1107 = vmatprep.subr.bf16.mxu0 0
    %1108 = vmatpush2.bf16.msra.mxu0 0
    %1109 = vmatprep.subr.bf16.mxu0 0
    %1110 = vmatpush2.bf16.msra.mxu0 0
    %1111 = vmatprep.subr.bf16.mxu0 0
    %1112 = vmatpush2.bf16.msra.mxu0 0
    %1113 = vmatprep.subr.bf16.mxu0 0
    %1114 = vmatpush2.bf16.msra.mxu0 0
    %1115 = vmatprep.subr.bf16.mxu0 0
    %1116 = vmatpush2.bf16.msra.mxu0 0
    %1117 = vmatprep.subr.bf16.mxu0 0
    %1118 = vmatpush2.bf16.msra.mxu0 0
    %1119 = vmatprep.subr.bf16.mxu0 0
    %1120 = vmatpush2.bf16.msra.mxu0 0
    %1121 = vmatprep.mubr.bf16.mxu0 0
    %1122 = vmatmul.mubr.bf16.gmra.mxu0 %v1024
    %v1123 = vpop.f32.mrf.mxu0
    %v1124 = vadd.f32 0.0, %v1123
    %v1125 = vpop.f32.mrf.mxu0
    %v1126 = vpop.f32.mrf.mxu0
    %v1127 = vpop.f32.mrf.mxu0
    %1128 = vdwg.mxu0
    %v1129 = vmul.f32 %v1124, %v857
    %v1130 = vrot.slane %v1129, 4
    %v1131 = vadd.f32 %v1129, %v1130
    %v1132 = vrot.slane %v1131, 2
    %v1133 = vadd.f32 %v1131, %v1132
    %v1134 = vrot.slane %v1133, 1
    %v1135 = vadd.f32 %v1133, %v1134
    %v1136 = vmul.f32 %v1135, 0.25
    %v1137 = vmul.f32 %v1124, %v858
    %v1138 = vrot.slane %v1137, 4
    %v1139 = vadd.f32 %v1137, %v1138
    %v1140 = vrot.slane %v1139, 2
    %v1141 = vadd.f32 %v1139, %v1140
    %v1142 = vrot.slane %v1141, 1
    %v1143 = vadd.f32 %v1141, %v1142
    %v1144 = vmul.f32 %v1143, 0.25
    %v1145 = vmul.f32 %v857, %v1136
    %v1146 = vmul.f32 %v858, %v1144
    %v1147 = vadd.f32 %v1145, %v1146
    %v1148 = vsub.f32 %v1124, %v1147
    %v1149 = vmul.f32 %v1148, %v1148
    %v1150 = vmul.f32 %v1149, %v857
    %v1151 = vrot.slane %v1150, 4
    %v1152 = vadd.f32 %v1150, %v1151
    %v1153 = vrot.slane %v1152, 2
    %v1154 = vadd.f32 %v1152, %v1153
    %v1155 = vrot.slane %v1154, 1
    %v1156 = vadd.f32 %v1154, %v1155
    %v1157 = vmul.f32 %v1156, 0.25
    %v1158 = vmul.f32 %v1149, %v858
    %v1159 = vrot.slane %v1158, 4
    %v1160 = vadd.f32 %v1158, %v1159
    %v1161 = vrot.slane %v1160, 2
    %v1162 = vadd.f32 %v1160, %v1161
    %v1163 = vrot.slane %v1162, 1
    %v1164 = vadd.f32 %v1162, %v1163
    %v1165 = vmul.f32 %v1164, 0.25
    %v1166 = vmul.f32 %v857, %v1157
    %v1167 = vmul.f32 %v858, %v1165
    %v1168 = vadd.f32 %v1166, %v1167
    %v1169 = vadd.f32 %v1168, 1e-05
    %v1170 = vrsqrt.pop %v1169
    %v1171 = vmul.f32 %v1148, %v1170
    %v1172 = vld [vmem:[%s7] sm:$0x1]
    %v1174 = vlaneseq
    %v1175 = vshrl.u32 %v1174, 7
    %v1176 = vsub.s32 0, %v1175
    %v1177 = vrot.slane %v1172, %v1176
    %v1179 = vmul.f32 %v1171, %v1177
    %v1180 = vld [vmem:[%s8] sm:$0x1]
    %v1182 = vlaneseq
    %v1183 = vshrl.u32 %v1182, 7
    %v1184 = vsub.s32 0, %v1183
    %v1185 = vrot.slane %v1180, %v1184
    %v1187 = vadd.f32 %v1179, %v1185
    %v1188 = vmax.f32 %v1187, 0.0
    %v1189 = vpack.c.bf16 %v1188, %v1188
    %v1190 = vld [vmem:[%s9] sm:$0xff]
    %v1191 = vld [vmem:[%s9 + $0x8] sm:$0xff]
    %v1192 = vld [vmem:[%s9 + $0x10] sm:$0xff]
    %v1193 = vld [vmem:[%s9 + $0x18] sm:$0xff]
    %v1194 = vld [vmem:[%s9 + $0x20] sm:$0xff]
    %v1195 = vld [vmem:[%s9 + $0x28] sm:$0xff]
    %v1196 = vld [vmem:[%s9 + $0x30] sm:$0xff]
    %v1197 = vld [vmem:[%s9 + $0x38] sm:$0xff]
    %v1198 = vld [vmem:[%s9 + $0x40] sm:$0xff]
    %v1199 = vld [vmem:[%s9 + $0x48] sm:$0xff]
    %v1200 = vld [vmem:[%s9 + $0x50] sm:$0xff]
    %v1201 = vld [vmem:[%s9 + $0x58] sm:$0xff]
    %v1202 = vld [vmem:[%s9 + $0x60] sm:$0xff]
    %v1203 = vld [vmem:[%s9 + $0x68] sm:$0xff]
    %v1204 = vld [vmem:[%s9 + $0x70] sm:$0xff]
    %v1205 = vld [vmem:[%s9 + $0x78] sm:$0xff]
    %v1222 = vunpack.c.l.b16 %v1190
    %v1223 = vunpack.c.h.b16 %v1190
    %v1224 = vunpack.c.l.b16 %v1191
    %v1225 = vunpack.c.h.b16 %v1191
    %v1226 = vunpack.c.l.b16 %v1192
    %v1227 = vunpack.c.h.b16 %v1192
    %v1228 = vunpack.c.l.b16 %v1193
    %v1229 = vunpack.c.h.b16 %v1193
    %v1230 = vunpack.c.l.b16 %v1194
    %v1231 = vunpack.c.h.b16 %v1194
    %v1232 = vunpack.c.l.b16 %v1195
    %v1233 = vunpack.c.h.b16 %v1195
    %v1234 = vunpack.c.l.b16 %v1196
    %v1235 = vunpack.c.h.b16 %v1196
    %v1236 = vunpack.c.l.b16 %v1197
    %v1237 = vunpack.c.h.b16 %v1197
    %v1238 = vunpack.c.l.b16 %v1198
    %v1239 = vunpack.c.h.b16 %v1198
    %v1240 = vunpack.c.l.b16 %v1199
    %v1241 = vunpack.c.h.b16 %v1199
    %v1242 = vunpack.c.l.b16 %v1200
    %v1243 = vunpack.c.h.b16 %v1200
    %v1244 = vunpack.c.l.b16 %v1201
    %v1245 = vunpack.c.h.b16 %v1201
    %v1246 = vunpack.c.l.b16 %v1202
    %v1247 = vunpack.c.h.b16 %v1202
    %v1248 = vunpack.c.l.b16 %v1203
    %v1249 = vunpack.c.h.b16 %v1203
    %v1250 = vunpack.c.l.b16 %v1204
    %v1251 = vunpack.c.h.b16 %v1204
    %v1252 = vunpack.c.l.b16 %v1205
    %v1253 = vunpack.c.h.b16 %v1205
    %v1254 = vpack.c.b16 %v1224, %v1222
    %v1255 = vpack.c.b16 %v1225, %v1223
    %v1256 = vpack.c.b16 %v1228, %v1226
    %v1257 = vpack.c.b16 %v1229, %v1227
    %v1258 = vpack.c.b16 %v1232, %v1230
    %v1259 = vpack.c.b16 %v1233, %v1231
    %v1260 = vpack.c.b16 %v1236, %v1234
    %v1261 = vpack.c.b16 %v1237, %v1235
    %v1262 = vpack.c.b16 %v1240, %v1238
    %v1263 = vpack.c.b16 %v1241, %v1239
    %v1264 = vpack.c.b16 %v1244, %v1242
    %v1265 = vpack.c.b16 %v1245, %v1243
    %v1266 = vpack.c.b16 %v1248, %v1246
    %v1267 = vpack.c.b16 %v1249, %v1247
    %v1268 = vpack.c.b16 %v1252, %v1250
    %v1269 = vpack.c.b16 %v1253, %v1251
    %1286 = vmatprep.subr.bf16.mxu0 %v1269
    %1287 = vmatpush1.bf16.msra.mxu0 %v1268
    %1288 = vmatprep.subr.bf16.mxu0 %v1267
    %1289 = vmatpush1.bf16.msra.mxu0 %v1266
    %1290 = vmatprep.subr.bf16.mxu0 %v1265
    %1291 = vmatpush1.bf16.msra.mxu0 %v1264
    %1292 = vmatprep.subr.bf16.mxu0 %v1263
    %1293 = vmatpush1.bf16.msra.mxu0 %v1262
    %1294 = vmatprep.subr.bf16.mxu0 %v1261
    %1295 = vmatpush1.bf16.msra.mxu0 %v1260
    %1296 = vmatprep.subr.bf16.mxu0 %v1259
    %1297 = vmatpush1.bf16.msra.mxu0 %v1258
    %1298 = vmatprep.subr.bf16.mxu0 %v1257
    %1299 = vmatpush1.bf16.msra.mxu0 %v1256
    %1300 = vmatprep.subr.bf16.mxu0 %v1255
    %1301 = vmatpush1.bf16.msra.mxu0 %v1254
    %1302 = vmatprep.subr.bf16.mxu0 0
    %1303 = vmatpush2.bf16.msra.mxu0 0
    %1304 = vmatprep.subr.bf16.mxu0 0
    %1305 = vmatpush2.bf16.msra.mxu0 0
    %1306 = vmatprep.subr.bf16.mxu0 0
    %1307 = vmatpush2.bf16.msra.mxu0 0
    %1308 = vmatprep.subr.bf16.mxu0 0
    %1309 = vmatpush2.bf16.msra.mxu0 0
    %1310 = vmatprep.subr.bf16.mxu0 0
    %1311 = vmatpush2.bf16.msra.mxu0 0
    %1312 = vmatprep.subr.bf16.mxu0 0
    %1313 = vmatpush2.bf16.msra.mxu0 0
    %1314 = vmatprep.subr.bf16.mxu0 0
    %1315 = vmatpush2.bf16.msra.mxu0 0
    %1316 = vmatprep.subr.bf16.mxu0 0
    %1317 = vmatpush2.bf16.msra.mxu0 0
    %1318 = vmatprep.mubr.bf16.mxu0 0
    %1319 = vmatmul.mubr.bf16.gmra.mxu0 %v1189
    %v1320 = vpop.f32.mrf.mxu0
    %v1321 = vadd.f32 0.0, %v1320
    %v1322 = vpop.f32.mrf.mxu0
    %v1323 = vadd.f32 0.0, %v1322
    %v1324 = vpop.f32.mrf.mxu0
    %v1325 = vpop.f32.mrf.mxu0
    %1326 = vdwg.mxu0
    %v1327 = vmul.f32 %v1321, %v857
    %v1328 = vmul.f32 %v1323, %v857
    %v1329 = vrot.slane %v1327, 4
    %v1330 = vadd.f32 %v1327, %v1329
    %v1331 = vrot.slane %v1330, 2
    %v1332 = vadd.f32 %v1330, %v1331
    %v1333 = vrot.slane %v1332, 1
    %v1334 = vadd.f32 %v1332, %v1333
    %v1335 = vrot.slane %v1328, 4
    %v1336 = vadd.f32 %v1328, %v1335
    %v1337 = vrot.slane %v1336, 2
    %v1338 = vadd.f32 %v1336, %v1337
    %v1339 = vrot.slane %v1338, 1
    %v1340 = vadd.f32 %v1338, %v1339
    %v1341 = vmul.f32 %v1334, 0.25
    %v1342 = vmul.f32 %v1340, 0.25
    %v1343 = vmul.f32 %v1321, %v858
    %v1344 = vmul.f32 %v1323, %v858
    %v1345 = vrot.slane %v1343, 4
    %v1346 = vadd.f32 %v1343, %v1345
    %v1347 = vrot.slane %v1346, 2
    %v1348 = vadd.f32 %v1346, %v1347
    %v1349 = vrot.slane %v1348, 1
    %v1350 = vadd.f32 %v1348, %v1349
    %v1351 = vrot.slane %v1344, 4
    %v1352 = vadd.f32 %v1344, %v1351
    %v1353 = vrot.slane %v1352, 2
    %v1354 = vadd.f32 %v1352, %v1353
    %v1355 = vrot.slane %v1354, 1
    %v1356 = vadd.f32 %v1354, %v1355
    %v1357 = vmul.f32 %v1350, 0.25
    %v1358 = vmul.f32 %v1356, 0.25
    %v1359 = vmul.f32 %v857, %v1341
    %v1360 = vmul.f32 %v857, %v1342
    %v1361 = vmul.f32 %v858, %v1357
    %v1362 = vmul.f32 %v858, %v1358
    %v1363 = vadd.f32 %v1359, %v1361
    %v1364 = vadd.f32 %v1360, %v1362
    %v1365 = vsub.f32 %v1321, %v1363
    %v1366 = vsub.f32 %v1323, %v1364
    %v1367 = vmul.f32 %v1365, %v1365
    %v1368 = vmul.f32 %v1366, %v1366
    %v1369 = vmul.f32 %v1367, %v857
    %v1370 = vmul.f32 %v1368, %v857
    %v1371 = vrot.slane %v1369, 4
    %v1372 = vadd.f32 %v1369, %v1371
    %v1373 = vrot.slane %v1372, 2
    %v1374 = vadd.f32 %v1372, %v1373
    %v1375 = vrot.slane %v1374, 1
    %v1376 = vadd.f32 %v1374, %v1375
    %v1377 = vrot.slane %v1370, 4
    %v1378 = vadd.f32 %v1370, %v1377
    %v1379 = vrot.slane %v1378, 2
    %v1380 = vadd.f32 %v1378, %v1379
    %v1381 = vrot.slane %v1380, 1
    %v1382 = vadd.f32 %v1380, %v1381
    %v1383 = vmul.f32 %v1376, 0.25
    %v1384 = vmul.f32 %v1382, 0.25
    %v1385 = vmul.f32 %v1367, %v858
    %v1386 = vmul.f32 %v1368, %v858
    %v1387 = vrot.slane %v1385, 4
    %v1388 = vadd.f32 %v1385, %v1387
    %v1389 = vrot.slane %v1388, 2
    %v1390 = vadd.f32 %v1388, %v1389
    %v1391 = vrot.slane %v1390, 1
    %v1392 = vadd.f32 %v1390, %v1391
    %v1393 = vrot.slane %v1386, 4
    %v1394 = vadd.f32 %v1386, %v1393
    %v1395 = vrot.slane %v1394, 2
    %v1396 = vadd.f32 %v1394, %v1395
    %v1397 = vrot.slane %v1396, 1
    %v1398 = vadd.f32 %v1396, %v1397
    %v1399 = vmul.f32 %v1392, 0.25
    %v1400 = vmul.f32 %v1398, 0.25
    %v1401 = vmul.f32 %v857, %v1383
    %v1402 = vmul.f32 %v857, %v1384
    %v1403 = vmul.f32 %v858, %v1399
    %v1404 = vmul.f32 %v858, %v1400
    %v1405 = vadd.f32 %v1401, %v1403
    %v1406 = vadd.f32 %v1402, %v1404
    %v1407 = vadd.f32 %v1405, 1e-05
    %v1408 = vadd.f32 %v1406, 1e-05
    %v1409 = vrsqrt.pop %v1407
    %v1410 = vrsqrt.pop %v1408
    %v1411 = vmul.f32 %v1365, %v1409
    %v1412 = vmul.f32 %v1366, %v1410
    %v1413 = vpack.c.bf16 %v1411, %v1411
    %v1414 = vpack.c.bf16 %v1412, %v1412
    %v1415 = vld [vmem:[%s10] sm:$0xf]
    %v1416 = vld [vmem:[%s10 + $0x4] sm:$0xf]
    %v1417 = vld [vmem:[%s10 + $0x8] sm:$0xf]
    %v1418 = vld [vmem:[%s10 + $0xc] sm:$0xf]
    %v1419 = vld [vmem:[%s10 + $0x10] sm:$0xf]
    %v1420 = vld [vmem:[%s10 + $0x14] sm:$0xf]
    %v1421 = vld [vmem:[%s10 + $0x18] sm:$0xf]
    %v1422 = vld [vmem:[%s10 + $0x1c] sm:$0xf]
    %v1423 = vld [vmem:[%s10 + $0x20] sm:$0xf]
    %v1424 = vld [vmem:[%s10 + $0x24] sm:$0xf]
    %v1425 = vld [vmem:[%s10 + $0x28] sm:$0xf]
    %v1426 = vld [vmem:[%s10 + $0x2c] sm:$0xf]
    %v1427 = vld [vmem:[%s10 + $0x30] sm:$0xf]
    %v1428 = vld [vmem:[%s10 + $0x34] sm:$0xf]
    %v1429 = vld [vmem:[%s10 + $0x38] sm:$0xf]
    %v1430 = vld [vmem:[%s10 + $0x3c] sm:$0xf]
    %v1431 = vld [vmem:[%s10 + $0x40] sm:$0xf]
    %v1432 = vld [vmem:[%s10 + $0x44] sm:$0xf]
    %v1433 = vld [vmem:[%s10 + $0x48] sm:$0xf]
    %v1434 = vld [vmem:[%s10 + $0x4c] sm:$0xf]
    %v1435 = vld [vmem:[%s10 + $0x50] sm:$0xf]
    %v1436 = vld [vmem:[%s10 + $0x54] sm:$0xf]
    %v1437 = vld [vmem:[%s10 + $0x58] sm:$0xf]
    %v1438 = vld [vmem:[%s10 + $0x5c] sm:$0xf]
    %v1439 = vld [vmem:[%s10 + $0x60] sm:$0xf]
    %v1440 = vld [vmem:[%s10 + $0x64] sm:$0xf]
    %v1441 = vld [vmem:[%s10 + $0x68] sm:$0xf]
    %v1442 = vld [vmem:[%s10 + $0x6c] sm:$0xf]
    %v1443 = vld [vmem:[%s10 + $0x70] sm:$0xf]
    %v1444 = vld [vmem:[%s10 + $0x74] sm:$0xf]
    %v1445 = vld [vmem:[%s10 + $0x78] sm:$0xf]
    %v1446 = vld [vmem:[%s10 + $0x7c] sm:$0xf]
    %v1479 = vunpack.c.l.b16 %v1415
    %v1480 = vunpack.c.l.b16 %v1416
    %v1481 = vunpack.c.l.b16 %v1417
    %v1482 = vunpack.c.l.b16 %v1418
    %v1483 = vunpack.c.l.b16 %v1419
    %v1484 = vunpack.c.l.b16 %v1420
    %v1485 = vunpack.c.l.b16 %v1421
    %v1486 = vunpack.c.l.b16 %v1422
    %v1487 = vunpack.c.l.b16 %v1423
    %v1488 = vunpack.c.l.b16 %v1424
    %v1489 = vunpack.c.l.b16 %v1425
    %v1490 = vunpack.c.l.b16 %v1426
    %v1491 = vunpack.c.l.b16 %v1427
    %v1492 = vunpack.c.l.b16 %v1428
    %v1493 = vunpack.c.l.b16 %v1429
    %v1494 = vunpack.c.l.b16 %v1430
    %v1495 = vunpack.c.l.b16 %v1431
    %v1496 = vunpack.c.l.b16 %v1432
    %v1497 = vunpack.c.l.b16 %v1433
    %v1498 = vunpack.c.l.b16 %v1434
    %v1499 = vunpack.c.l.b16 %v1435
    %v1500 = vunpack.c.l.b16 %v1436
    %v1501 = vunpack.c.l.b16 %v1437
    %v1502 = vunpack.c.l.b16 %v1438
    %v1503 = vunpack.c.l.b16 %v1439
    %v1504 = vunpack.c.l.b16 %v1440
    %v1505 = vunpack.c.l.b16 %v1441
    %v1506 = vunpack.c.l.b16 %v1442
    %v1507 = vunpack.c.l.b16 %v1443
    %v1508 = vunpack.c.l.b16 %v1444
    %v1509 = vunpack.c.l.b16 %v1445
    %v1510 = vunpack.c.l.b16 %v1446
    %v1511 = vpack.c.b16 %v1480, %v1479
    %v1512 = vpack.c.b16 %v1482, %v1481
    %v1513 = vpack.c.b16 %v1484, %v1483
    %v1514 = vpack.c.b16 %v1486, %v1485
    %v1515 = vpack.c.b16 %v1488, %v1487
    %v1516 = vpack.c.b16 %v1490, %v1489
    %v1517 = vpack.c.b16 %v1492, %v1491
    %v1518 = vpack.c.b16 %v1494, %v1493
    %v1519 = vpack.c.b16 %v1496, %v1495
    %v1520 = vpack.c.b16 %v1498, %v1497
    %v1521 = vpack.c.b16 %v1500, %v1499
    %v1522 = vpack.c.b16 %v1502, %v1501
    %v1523 = vpack.c.b16 %v1504, %v1503
    %v1524 = vpack.c.b16 %v1506, %v1505
    %v1525 = vpack.c.b16 %v1508, %v1507
    %v1526 = vpack.c.b16 %v1510, %v1509
    %1543 = vmatprep.subr.bf16.mxu0 0
    %1544 = vmatpush1.bf16.msra.mxu0 %v1518
    %1545 = vmatprep.subr.bf16.mxu0 0
    %1546 = vmatpush1.bf16.msra.mxu0 %v1517
    %1547 = vmatprep.subr.bf16.mxu0 0
    %1548 = vmatpush1.bf16.msra.mxu0 %v1516
    %1549 = vmatprep.subr.bf16.mxu0 0
    %1550 = vmatpush1.bf16.msra.mxu0 %v1515
    %1551 = vmatprep.subr.bf16.mxu0 0
    %1552 = vmatpush1.bf16.msra.mxu0 %v1514
    %1553 = vmatprep.subr.bf16.mxu0 0
    %1554 = vmatpush1.bf16.msra.mxu0 %v1513
    %1555 = vmatprep.subr.bf16.mxu0 0
    %1556 = vmatpush1.bf16.msra.mxu0 %v1512
    %1557 = vmatprep.subr.bf16.mxu0 0
    %1558 = vmatpush1.bf16.msra.mxu0 %v1511
    %1559 = vmatprep.subr.bf16.mxu0 0
    %1560 = vmatpush2.bf16.msra.mxu0 %v1526
    %1561 = vmatprep.subr.bf16.mxu0 0
    %1562 = vmatpush2.bf16.msra.mxu0 %v1525
    %1563 = vmatprep.subr.bf16.mxu0 0
    %1564 = vmatpush2.bf16.msra.mxu0 %v1524
    %1565 = vmatprep.subr.bf16.mxu0 0
    %1566 = vmatpush2.bf16.msra.mxu0 %v1523
    %1567 = vmatprep.subr.bf16.mxu0 0
    %1568 = vmatpush2.bf16.msra.mxu0 %v1522
    %1569 = vmatprep.subr.bf16.mxu0 0
    %1570 = vmatpush2.bf16.msra.mxu0 %v1521
    %1571 = vmatprep.subr.bf16.mxu0 0
    %1572 = vmatpush2.bf16.msra.mxu0 %v1520
    %1573 = vmatprep.subr.bf16.mxu0 0
    %1574 = vmatpush2.bf16.msra.mxu0 %v1519
    %1575 = vmatprep.mubr.bf16.mxu0 %v1414
    %1576 = vmatmul.mubr.bf16.gmra.mxu0 %v1413
    %v1577 = vpop.f32.mrf.mxu0
    %v1578 = vadd.f32 0.0, %v1577
    %v1579 = vpop.f32.mrf.mxu0
    %v1580 = vpop.f32.mrf.mxu0
    %v1581 = vpop.f32.mrf.mxu0
    %1582 = vdwg.mxu0
    %v1583 = vmul.f32 %v1578, %v857
    %v1584 = vrot.slane %v1583, 4
    %v1585 = vadd.f32 %v1583, %v1584
    %v1586 = vrot.slane %v1585, 2
    %v1587 = vadd.f32 %v1585, %v1586
    %v1588 = vrot.slane %v1587, 1
    %v1589 = vadd.f32 %v1587, %v1588
    %v1590 = vmul.f32 %v1589, 0.25
    %v1591 = vmul.f32 %v1578, %v858
    %v1592 = vrot.slane %v1591, 4
    %v1593 = vadd.f32 %v1591, %v1592
    %v1594 = vrot.slane %v1593, 2
    %v1595 = vadd.f32 %v1593, %v1594
    %v1596 = vrot.slane %v1595, 1
    %v1597 = vadd.f32 %v1595, %v1596
    %v1598 = vmul.f32 %v1597, 0.25
    %v1599 = vmul.f32 %v857, %v1590
    %v1600 = vmul.f32 %v858, %v1598
    %v1601 = vadd.f32 %v1599, %v1600
    %v1602 = vsub.f32 %v1578, %v1601
    %v1603 = vmul.f32 %v1602, %v1602
    %v1604 = vmul.f32 %v1603, %v857
    %v1605 = vrot.slane %v1604, 4
    %v1606 = vadd.f32 %v1604, %v1605
    %v1607 = vrot.slane %v1606, 2
    %v1608 = vadd.f32 %v1606, %v1607
    %v1609 = vrot.slane %v1608, 1
    %v1610 = vadd.f32 %v1608, %v1609
    %v1611 = vmul.f32 %v1610, 0.25
    %v1612 = vmul.f32 %v1603, %v858
    %v1613 = vrot.slane %v1612, 4
    %v1614 = vadd.f32 %v1612, %v1613
    %v1615 = vrot.slane %v1614, 2
    %v1616 = vadd.f32 %v1614, %v1615
    %v1617 = vrot.slane %v1616, 1
    %v1618 = vadd.f32 %v1616, %v1617
    %v1619 = vmul.f32 %v1618, 0.25
    %v1620 = vmul.f32 %v857, %v1611
    %v1621 = vmul.f32 %v858, %v1619
    %v1622 = vadd.f32 %v1620, %v1621
    %v1623 = vadd.f32 %v1622, 1e-05
    %v1624 = vrsqrt.pop %v1623
    %v1625 = vmul.f32 %v1602, %v1624
    %v1626 = vld [vmem:[%s11] sm:$0x1]
    %v1628 = vlaneseq
    %v1629 = vshrl.u32 %v1628, 7
    %v1630 = vsub.s32 0, %v1629
    %v1631 = vrot.slane %v1626, %v1630
    %v1633 = vmul.f32 %v1625, %v1631
    %v1634 = vld [vmem:[%s12] sm:$0x1]
    %v1636 = vlaneseq
    %v1637 = vshrl.u32 %v1636, 7
    %v1638 = vsub.s32 0, %v1637
    %v1639 = vrot.slane %v1634, %v1638
    %v1641 = vadd.f32 %v1633, %v1639
    %v1642 = vmax.f32 %v1641, 0.0
    %v1643 = vpack.c.bf16 %v1642, %v1642
    %v1644 = vld [vmem:[%s13] sm:$0xff]
    %v1645 = vld [vmem:[%s13 + $0x8] sm:$0xff]
    %v1646 = vld [vmem:[%s13 + $0x10] sm:$0xff]
    %v1647 = vld [vmem:[%s13 + $0x18] sm:$0xff]
    %v1648 = vld [vmem:[%s13 + $0x20] sm:$0xff]
    %v1649 = vld [vmem:[%s13 + $0x28] sm:$0xff]
    %v1650 = vld [vmem:[%s13 + $0x30] sm:$0xff]
    %v1651 = vld [vmem:[%s13 + $0x38] sm:$0xff]
    %v1652 = vld [vmem:[%s13 + $0x40] sm:$0xff]
    %v1653 = vld [vmem:[%s13 + $0x48] sm:$0xff]
    %v1654 = vld [vmem:[%s13 + $0x50] sm:$0xff]
    %v1655 = vld [vmem:[%s13 + $0x58] sm:$0xff]
    %v1656 = vld [vmem:[%s13 + $0x60] sm:$0xff]
    %v1657 = vld [vmem:[%s13 + $0x68] sm:$0xff]
    %v1658 = vld [vmem:[%s13 + $0x70] sm:$0xff]
    %v1659 = vld [vmem:[%s13 + $0x78] sm:$0xff]
    %v1660 = vld [vmem:[%s14] sm:$0x3]
    %v1662 = vlaneseq
    %v1663 = vshrl.u32 %v1662, 7
    %v1664 = vsub.s32 0, %v1663
    %v1665 = vrot.slane %v1660, %v1664
    %v1666 = vlaneseq
    %v1667 = vshrl.u32 %v1666, 7
    %v1668 = vsub.s32 1, %v1667
    %v1669 = vrot.slane %v1660, %v1668
    %v1688 = vunpack.c.l.b16 %v1644
    %v1689 = vunpack.c.h.b16 %v1644
    %v1690 = vunpack.c.l.b16 %v1645
    %v1691 = vunpack.c.h.b16 %v1645
    %v1692 = vunpack.c.l.b16 %v1646
    %v1693 = vunpack.c.h.b16 %v1646
    %v1694 = vunpack.c.l.b16 %v1647
    %v1695 = vunpack.c.h.b16 %v1647
    %v1696 = vunpack.c.l.b16 %v1648
    %v1697 = vunpack.c.h.b16 %v1648
    %v1698 = vunpack.c.l.b16 %v1649
    %v1699 = vunpack.c.h.b16 %v1649
    %v1700 = vunpack.c.l.b16 %v1650
    %v1701 = vunpack.c.h.b16 %v1650
    %v1702 = vunpack.c.l.b16 %v1651
    %v1703 = vunpack.c.h.b16 %v1651
    %v1704 = vunpack.c.l.b16 %v1652
    %v1705 = vunpack.c.h.b16 %v1652
    %v1706 = vunpack.c.l.b16 %v1653
    %v1707 = vunpack.c.h.b16 %v1653
    %v1708 = vunpack.c.l.b16 %v1654
    %v1709 = vunpack.c.h.b16 %v1654
    %v1710 = vunpack.c.l.b16 %v1655
    %v1711 = vunpack.c.h.b16 %v1655
    %v1712 = vunpack.c.l.b16 %v1656
    %v1713 = vunpack.c.h.b16 %v1656
    %v1714 = vunpack.c.l.b16 %v1657
    %v1715 = vunpack.c.h.b16 %v1657
    %v1716 = vunpack.c.l.b16 %v1658
    %v1717 = vunpack.c.h.b16 %v1658
    %v1718 = vunpack.c.l.b16 %v1659
    %v1719 = vunpack.c.h.b16 %v1659
    %v1720 = vpack.c.b16 %v1690, %v1688
    %v1721 = vpack.c.b16 %v1691, %v1689
    %v1722 = vpack.c.b16 %v1694, %v1692
    %v1723 = vpack.c.b16 %v1695, %v1693
    %v1724 = vpack.c.b16 %v1698, %v1696
    %v1725 = vpack.c.b16 %v1699, %v1697
    %v1726 = vpack.c.b16 %v1702, %v1700
    %v1727 = vpack.c.b16 %v1703, %v1701
    %v1728 = vpack.c.b16 %v1706, %v1704
    %v1729 = vpack.c.b16 %v1707, %v1705
    %v1730 = vpack.c.b16 %v1710, %v1708
    %v1731 = vpack.c.b16 %v1711, %v1709
    %v1732 = vpack.c.b16 %v1714, %v1712
    %v1733 = vpack.c.b16 %v1715, %v1713
    %v1734 = vpack.c.b16 %v1718, %v1716
    %v1735 = vpack.c.b16 %v1719, %v1717
    %1752 = vmatprep.subr.bf16.mxu0 %v1735
    %1753 = vmatpush1.bf16.msra.mxu0 %v1734
    %1754 = vmatprep.subr.bf16.mxu0 %v1733
    %1755 = vmatpush1.bf16.msra.mxu0 %v1732
    %1756 = vmatprep.subr.bf16.mxu0 %v1731
    %1757 = vmatpush1.bf16.msra.mxu0 %v1730
    %1758 = vmatprep.subr.bf16.mxu0 %v1729
    %1759 = vmatpush1.bf16.msra.mxu0 %v1728
    %1760 = vmatprep.subr.bf16.mxu0 %v1727
    %1761 = vmatpush1.bf16.msra.mxu0 %v1726
    %1762 = vmatprep.subr.bf16.mxu0 %v1725
    %1763 = vmatpush1.bf16.msra.mxu0 %v1724
    %1764 = vmatprep.subr.bf16.mxu0 %v1723
    %1765 = vmatpush1.bf16.msra.mxu0 %v1722
    %1766 = vmatprep.subr.bf16.mxu0 %v1721
    %1767 = vmatpush1.bf16.msra.mxu0 %v1720
    %1768 = vmatprep.subr.bf16.mxu0 0
    %1769 = vmatpush2.bf16.msra.mxu0 0
    %1770 = vmatprep.subr.bf16.mxu0 0
    %1771 = vmatpush2.bf16.msra.mxu0 0
    %1772 = vmatprep.subr.bf16.mxu0 0
    %1773 = vmatpush2.bf16.msra.mxu0 0
    %1774 = vmatprep.subr.bf16.mxu0 0
    %1775 = vmatpush2.bf16.msra.mxu0 0
    %1776 = vmatprep.subr.bf16.mxu0 0
    %1777 = vmatpush2.bf16.msra.mxu0 0
    %1778 = vmatprep.subr.bf16.mxu0 0
    %1779 = vmatpush2.bf16.msra.mxu0 0
    %1780 = vmatprep.subr.bf16.mxu0 0
    %1781 = vmatpush2.bf16.msra.mxu0 0
    %1782 = vmatprep.subr.bf16.mxu0 0
    %1783 = vmatpush2.bf16.msra.mxu0 0
    %1784 = vmatprep.mubr.bf16.mxu0 0
    %1785 = vmatmul.mubr.bf16.gmra.mxu0 %v1643
    %v1786 = vpop.f32.mrf.mxu0
    %v1787 = vadd.f32 %v1665, %v1786
    %v1788 = vpop.f32.mrf.mxu0
    %v1789 = vadd.f32 %v1669, %v1788
    %v1790 = vpop.f32.mrf.mxu0
    %v1791 = vpop.f32.mrf.mxu0
    %1792 = vdwg.mxu0
    %v1793 = vrot.slane %v1411, 4
    %v1794 = vrot.slane %v1412, 4
    %v1795 = vmul.f32 %v1787, %v1793
    %v1796 = vmul.f32 %v1789, %v1794
    %v1797 = vadd.f32 %v1795, %v1796
    %1798 = vadd.xlane.f32.xlu0 %v1797
    %v1799 = vpop.xlane.xlu0 %1798
    %v1800 = vmul.f32 %v1787, %v1787
    %v1801 = vmul.f32 %v1789, %v1789
    %v1802 = vadd.f32 %v1800, %v1801
    %1803 = vadd.xlane.f32.xlu0 %v1802
    %v1804 = vpop.xlane.xlu0 %1803
    %v1805 = vmul.f32 %v1793, %v1793
    %v1806 = vmul.f32 %v1794, %v1794
    %v1807 = vadd.f32 %v1805, %v1806
    %1808 = vadd.xlane.f32.xlu0 %v1807
    %v1809 = vpop.xlane.xlu0 %1808
    %v1810 = vmax.f32 %v1804, 1e-16
    %v1811 = vrsqrt.pop %v1810
    %v1812 = vmul.f32 %v1799, %v1811
    %v1813 = vmax.f32 %v1809, 1e-16
    %v1814 = vrsqrt.pop %v1813
    %v1815 = vmul.f32 %v1812, %v1814
    %vm1816 = vcmask 7168
    %v1817 = vsel %vm1816, %v1815, 0.0
    %1818 = vadd.xlane.f32.xlu0 %v1817
    %v1819 = vpop.xlane.xlu0 %1818
    %v1820 = vrot.slane %v1819, 4
    %v1821 = vadd.f32 %v1819, %v1820
    %v1822 = vrot.slane %v1821, 2
    %v1823 = vadd.f32 %v1821, %v1822
    %v1824 = vrot.slane %v1823, 1
    %v1825 = vadd.f32 %v1823, %v1824
    %s1826 = vtos %v1825
    %v1827 = vrcp.pop 8.0
    %s1828 = vtos %v1827
    %s1829 = smul.f32 %s1826, %s1828
    %s1830 = ssub.f32 0.0, %s1829
    %v1831 = vstv %s1830
    %vm1832 = vcmask 0
    %1833 = vst.msk [vmem:[#allocation2] sm:$0x1] %vm1832, %v1831
    // Predicated region
    $region62: #{simsiam_forward.1} parent=1 // pred_check
      _
    $region63: #{simsiam_forward.1} parent=1 // pred_check_branch
      %1835 = sbr.rel (0) target = $region65
    $region64: #{simsiam_forward.1} parent=1 // pred_region
      %s1837 = ssub.s32 16, 16
      %1838 = vsyncadd [#allocation3], %s1837
      %s1840 = sshll.u32 [#allocation2], 4
      %s1841 = int_to_ptr.vmem [resolvable:$true] %s1840
      %1843 = dma.vmem_to_hbm [thread:$0]  %s1841, 16, %s15, [#allocation3]
    $region65: #{simsiam_forward.1} parent=1 // pred_fallthru
      _
    // Predicated region
    $region66: #{simsiam_forward.1} parent=1 // pred_check
      _
    $region67: #{simsiam_forward.1} parent=1 // pred_check_branch
      %1845 = sbr.rel (0) target = $region69
    $region68: #{simsiam_forward.1} parent=1 // pred_region
      %1846 = dma.done [#allocation3], 16
    $region69: #{simsiam_forward.1} parent=1 // pred_fallthru
      _
    %1847 = vsyncpa [#allocation3], 1

</llo_original>
